<compile_context>
chip_gen: v5e
topology: v5e:2x2
jax: 0.10.0
libtpu: 0.0.40
codegen_flags: <defaults>
</compile_context>

<pallas_src>
import functools

import jax
import jax.numpy as jnp
from jax.experimental import pallas as pl
from jax.experimental.pallas import tpu as pltpu


# ----------------------------------------------------------------------------
# Chip-generation helpers
# ----------------------------------------------------------------------------
def _device_kind():
    try:
        return jax.devices()[0].device_kind.lower()
    except Exception:
        return ""


def _has_bf16_vpu():
    k = _device_kind()
    return any(tag in k for tag in ("v6", "v7", "7x"))


def _compute_dtype():
    # bf16 slab/image on v6e/v7x (bf16 VALU + bf16 MXU), f32 on v5e and older.
    return jnp.bfloat16 if _has_bf16_vpu() else jnp.float32


def _vmem_capacity_bytes():
    try:
        return int(pltpu.get_tpu_info().vmem_capacity_bytes)
    except Exception:
        k = _device_kind()
        return (64 << 20) if ("v7" in k or "7x" in k) else (128 << 20)


# ----------------------------------------------------------------------------
# Tiling / VMEM budgeting
# ----------------------------------------------------------------------------
def _vmem_need_bytes(T, C, HW_pad, img_bytes):
    img_blk = 2 * C * HW_pad * img_bytes          # double-buffered full-image block
    small = 2 * (2 * T + 2 * T + C * T) * 4       # grid / flow / out blocks (x2 buf)
    slab = HW_pad * T * (4 + 2 * img_bytes)       # int32 iota + ~2 live one-hot temps
    return img_blk + small + slab + (2 << 20)


def _choose_tile(HW_pad, N, C, img_bytes, vmem_budget, prefer_large):
    if HW_pad <= 512:
        # Tiny problem: one tile per batch step (per-step overhead dominated) ...
        T = HW_pad
        if N == 1 and HW_pad >= 256:
            # ... but keep >= 2 grid steps when N == 1 so both v7x TCs get work.
            half = ((HW_pad // 2) // 128) * 128
            T = half if (half >= 128 and HW_pad % half == 0) else 128
        return T
    candidates = (512, 256, 128) if prefer_large else (128,)
    for T in candidates:
        if HW_pad % T == 0 and _vmem_need_bytes(T, C, HW_pad, img_bytes) <= vmem_budget:
            return T
    return 128


# ----------------------------------------------------------------------------
# Kernel
# ----------------------------------------------------------------------------
def _backwarp_kernel(grid_ref, img_ref, flow_ref, out_ref, *, H, W, HW_pad, slab_dtype):
    # grid_ref: (2, T)        base gridX / gridY for this destination tile (f32)
    # img_ref:  (1, C, HWp)   full (padded) image for this batch element (slab_dtype)
    # flow_ref: (1, 2, T)     flow (u, v) for this destination tile (f32)
    # out_ref:  (1, C, T)     output tile (image dtype)
    T = out_ref.shape[-1]

    img = img_ref[0]                          # (C, HWp)

    g = grid_ref[...]                         # (2, T)
    gx = g[0:1, :]
    gy = g[1:2, :]
    fl = flow_ref[0]                          # (2, T)
    u = fl[0:1, :]
    v = fl[1:2, :]

    # align_corners=False: sample coordinate = grid + flow - 0.5
    ix = gx + u - 0.5
    iy = gy + v - 0.5
    x0f = jnp.floor(ix)
    y0f = jnp.floor(iy)
    wx = ix - x0f                             # bilinear weights (1, T) f32
    wy = iy - y0f
    x0 = x0f.astype(jnp.int32)
    y0 = y0f.astype(jnp.int32)
    x1 = x0 + 1
    y1 = y0 + 1

    # Source flat index along the rows of the one-hot slab. Regenerated per
    # step (single cheap iota op); a pl.when(first-step) scratch init would be
    # unsafe under megacore "parallel" sharding.
    q = jax.lax.broadcasted_iota(jnp.int32, (HW_pad, T), 0)

    def gather(xi, yi):
        # Unweighted one-hot gather: (C, HWp) @ (HWp, T) on the MXU.
        onehot = (q == (yi * W + xi)).astype(slab_dtype)                  # (HWp, T)
        return jnp.dot(img, onehot, preferred_element_type=jnp.float32)  # (C, T) f32

    def wmask(xi, yi, wgt):
        # zeros padding: out-of-bounds corners get weight 0, so any index
        # aliasing from negative / overflowing xi, yi is harmless.
        valid = (xi >= 0) & (xi <= W - 1) & (yi >= 0) & (yi <= H - 1)
        return jnp.where(valid, wgt, 0.0)                                 # (1, T) f32

    out = (gather(x0, y0) * wmask(x0, y0, (1.0 - wx) * (1.0 - wy))
           + gather(x1, y0) * wmask(x1, y0, wx * (1.0 - wy))
           + gather(x0, y1) * wmask(x0, y1, (1.0 - wx) * wy)
           + gather(x1, y1) * wmask(x1, y1, wx * wy))                     # (C, T) f32

    out_ref[0] = out.astype(out_ref.dtype)


# ----------------------------------------------------------------------------
# Wrapper
# ----------------------------------------------------------------------------
def backwarp(img, flow, *, compute_dtype=None):
    """I0 = backwarp(I1=img, F_0_1=flow).  img: (N,C,H,W) f32, flow: (N,2,H,W) f32."""
    N, C, H, W = img.shape
    assert flow.shape == (N, 2, H, W)
    HW = H * W
    HW_pad = ((HW + 127) // 128) * 128        # lane-align the flattened pixel axis

    if compute_dtype is None:
        compute_dtype = _compute_dtype()
    img_bytes = jnp.dtype(compute_dtype).itemsize

    vmem_cap = _vmem_capacity_bytes()
    vmem_budget = int(0.75 * vmem_cap)
    T = _choose_tile(HW_pad, N, C, img_bytes, vmem_budget, prefer_large=_has_bf16_vpu())
    n_tiles = HW_pad // T

    img_flat = img.reshape(N, C, HW).astype(compute_dtype)
    flow_flat = flow.reshape(N, 2, HW)
    if HW_pad != HW:
        pad = HW_pad - HW
        img_flat = jnp.pad(img_flat, ((0, 0), (0, 0), (0, pad)))
        flow_flat = jnp.pad(flow_flat, ((0, 0), (0, 0), (0, pad)))

    # Constant base grid (the nn.Module's gridX / gridY buffers), lane-dense (2, HWp).
    d = jnp.arange(HW_pad, dtype=jnp.int32)
    gy = d // W
    gx = d - gy * W
    grid_xy = jnp.stack([gx.astype(jnp.float32), gy.astype(jnp.float32)], axis=0)

    cost = pl.CostEstimate(
        flops=8 * N * C * HW_pad * HW_pad,               # 4 matmuls per tile
        transcendentals=0,
        bytes_accessed=(N * C * HW_pad * img_bytes       # image, DMA'd once per batch
                        + 4 * (N * 2 * HW_pad            # flow
                               + 2 * HW_pad              # base grid
                               + N * C * HW_pad)),       # output
    )

    kernel = functools.partial(_backwarp_kernel, H=H, W=W, HW_pad=HW_pad,
                               slab_dtype=compute_dtype)
    out_flat = pl.pallas_call(
        kernel,
        out_shape=jax.ShapeDtypeStruct((N, C, HW_pad), img.dtype),
        grid_spec=pltpu.PrefetchScalarGridSpec(
            num_scalar_prefetch=0,
            grid=(N, n_tiles),
            in_specs=[
                pl.BlockSpec((2, T), lambda b, j: (0, j)),          # base grid tile
                pl.BlockSpec((1, C, HW_pad), lambda b, j: (b, 0, 0)),  # full image / batch
                pl.BlockSpec((1, 2, T), lambda b, j: (b, 0, j)),    # flow tile
            ],
            out_specs=pl.BlockSpec((1, C, T), lambda b, j: (b, 0, j)),
        ),
        compiler_params=pltpu.CompilerParams(
            dimension_semantics=("parallel", "parallel"),
            vmem_limit_bytes=vmem_budget,
        ),
        cost_estimate=cost,
    )(grid_xy, img_flat, flow_flat)

    return out_flat[..., :HW].reshape(N, C, H, W)


# ----------------------------------------------------------------------------
# Pure-JAX reference (torch grid_sample bilinear / zeros / align_corners=False)
# ----------------------------------------------------------------------------
def backwarp_ref(img, flow):
    N, C, H, W = img.shape
    HW = H * W
    u = flow[:, 0]
    v = flow[:, 1]
    gx = jnp.arange(W, dtype=jnp.float32)[None, None, :]
    gy = jnp.arange(H, dtype=jnp.float32)[None, :, None]
    ix = gx + u - 0.5
    iy = gy + v - 0.5
    x0f = jnp.floor(ix)
    y0f = jnp.floor(iy)
    wx = ix - x0f
    wy = iy - y0f
    x0 = x0f.astype(jnp.int32)
    y0 = y0f.astype(jnp.int32)
    img_flat = img.reshape(N, C, HW)

    def gather(xi, yi, wgt):
        valid = ((xi >= 0) & (xi <= W - 1) & (yi >= 0) & (yi <= H - 1)).astype(img.dtype)
        xc = jnp.clip(xi, 0, W - 1)
        yc = jnp.clip(yi, 0, H - 1)
        idx = (yc * W + xc).reshape(N, 1, HW)
        vals = jnp.take_along_axis(img_flat, jnp.broadcast_to(idx, (N, C, HW)), axis=2)
        return vals.reshape(N, C, H, W) * (wgt * valid)[:, None]

    return (gather(x0, y0, (1.0 - wx) * (1.0 - wy))
            + gather(x0 + 1, y0, wx * (1.0 - wy))
            + gather(x0, y0 + 1, (1.0 - wx) * wy)
            + gather(x0 + 1, y0 + 1, wx * wy))


if __name__ == "__main__":
    key = jax.random.PRNGKey(0)
    k_img, k_flow = jax.random.split(key)
    N, C, H, W = 2, 4, 16, 16
    img = jax.random.normal(k_img, (N, C, H, W), dtype=jnp.float32)
    # flows of a few pixels, some pushing samples out of bounds (exercises zeros padding)
    flow = 3.0 * jax.random.normal(k_flow, (N, 2, H, W), dtype=jnp.float32)

    out = jax.block_until_ready(backwarp(img, flow))
    assert out.shape == (N, C, H, W), out.shape

    # Reference uses the same image precision the kernel's MXU operand uses
    # (bf16 on v6e/v7x, f32 otherwise); all weights/accumulation are f32 in both.
    cdtype = _compute_dtype()
    ref = backwarp_ref(img.astype(cdtype).astype(jnp.float32), flow)
    max_err = float(jnp.max(jnp.abs(out - ref)))
    assert max_err < 1e-4, max_err
    print("KERNEL_OK")
</pallas_src>

<mosaic_0001>
module attributes {stable_mosaic.version = 11 : i64} {
  func.func @_backwarp_kernel(%arg0: i32, %arg1: i32, %arg2: memref<2x256xf32, #tpu.memory_space<vmem>>, %arg3: memref<1x4x256xf32, #tpu.memory_space<vmem>>, %arg4: memref<1x2x256xf32, #tpu.memory_space<vmem>>, %arg5: memref<1x4x256xf32, #tpu.memory_space<vmem>>) attributes {dimension_semantics = [#tpu.dimension_semantics<parallel>, #tpu.dimension_semantics<parallel>], iteration_bounds = array<i64: 2, 1>, scalar_prefetch = 0 : i64, scratch_operands = 0 : i64, tpu.core_type = #tpu.core_type<tc>, window_params = [{transform_indices = @transform_0, window_bounds = array<i64: 2, 256>}, {transform_indices = @transform_1, window_bounds = array<i64: 1, 4, 256>}, {transform_indices = @transform_2, window_bounds = array<i64: 1, 2, 256>}, {transform_indices = @transform_3, window_bounds = array<i64: 1, 4, 256>}]} {
    %c0 = arith.constant 0 : index
    %c0_0 = arith.constant 0 : index
    %c0_1 = arith.constant 0 : index
    %0 = vector.load %arg3[%c0, %c0_0, %c0_1] : memref<1x4x256xf32, #tpu.memory_space<vmem>>, vector<1x4x256xf32>
    %1 = vector.shape_cast %0 : vector<1x4x256xf32> to vector<4x256xf32>
    %c0_2 = arith.constant 0 : index
    %c0_3 = arith.constant 0 : index
    %2 = vector.load %arg2[%c0_2, %c0_3] : memref<2x256xf32, #tpu.memory_space<vmem>>, vector<2x256xf32>
    %3 = vector.extract_strided_slice %2 {offsets = [0, 0], sizes = [1, 256], strides = [1, 1]} : vector<2x256xf32> to vector<1x256xf32>
    %4 = vector.extract_strided_slice %2 {offsets = [1, 0], sizes = [1, 256], strides = [1, 1]} : vector<2x256xf32> to vector<1x256xf32>
    %c0_4 = arith.constant 0 : index
    %c0_5 = arith.constant 0 : index
    %c0_6 = arith.constant 0 : index
    %5 = vector.load %arg4[%c0_4, %c0_5, %c0_6] : memref<1x2x256xf32, #tpu.memory_space<vmem>>, vector<1x2x256xf32>
    %6 = vector.shape_cast %5 : vector<1x2x256xf32> to vector<2x256xf32>
    %7 = vector.extract_strided_slice %6 {offsets = [0, 0], sizes = [1, 256], strides = [1, 1]} : vector<2x256xf32> to vector<1x256xf32>
    %8 = vector.extract_strided_slice %6 {offsets = [1, 0], sizes = [1, 256], strides = [1, 1]} : vector<2x256xf32> to vector<1x256xf32>
    %9 = arith.addf %3, %7 : vector<1x256xf32>
    %cst = arith.constant 5.000000e-01 : f32
    %10 = vector.broadcast %cst : f32 to vector<1x256xf32>
    %11 = arith.subf %9, %10 : vector<1x256xf32>
    %12 = arith.addf %4, %8 : vector<1x256xf32>
    %cst_7 = arith.constant 5.000000e-01 : f32
    %13 = vector.broadcast %cst_7 : f32 to vector<1x256xf32>
    %14 = arith.subf %12, %13 : vector<1x256xf32>
    %15 = math.floor %11 : vector<1x256xf32>
    %16 = math.floor %14 : vector<1x256xf32>
    %17 = arith.subf %11, %15 : vector<1x256xf32>
    %18 = arith.subf %14, %16 : vector<1x256xf32>
    %19 = arith.fptosi %15 : vector<1x256xf32> to vector<1x256xi32>
    %20 = arith.fptosi %16 : vector<1x256xf32> to vector<1x256xi32>
    %c1_i32 = arith.constant 1 : i32
    %21 = vector.broadcast %c1_i32 : i32 to vector<1x256xi32>
    %22 = arith.addi %19, %21 : vector<1x256xi32>
    %c1_i32_8 = arith.constant 1 : i32
    %23 = vector.broadcast %c1_i32_8 : i32 to vector<1x256xi32>
    %24 = arith.addi %20, %23 : vector<1x256xi32>
    %25 = tpu.iota {dimensions = array<i32: 0>} : vector<256x256xi32>
    %c16_i32 = arith.constant 16 : i32
    %26 = vector.broadcast %c16_i32 : i32 to vector<1x256xi32>
    %27 = arith.muli %20, %26 : vector<1x256xi32>
    %28 = arith.addi %27, %19 : vector<1x256xi32>
    %29 = vector.broadcast %28 : vector<1x256xi32> to vector<256x256xi32>
    %30 = arith.cmpi eq, %25, %29 : vector<256x256xi32>
    %31 = arith.extui %30 : vector<256x256xi1> to vector<256x256xi32>
    %32 = arith.sitofp %31 : vector<256x256xi32> to vector<256x256xf32>
    %cst_9 = arith.constant dense<0.000000e+00> : vector<4x256xf32>
    %33 = tpu.matmul %1, %32, %cst_9 {dimension_numbers = #tpu.dot_dimension_numbers<[1], [0], [0], [1], [0, 0, 1, 1], [], []>} : vector<4x256xf32>, vector<256x256xf32>, vector<4x256xf32> -> vector<4x256xf32>
    %cst_10 = arith.constant 1.000000e+00 : f32
    %34 = vector.broadcast %cst_10 : f32 to vector<1x256xf32>
    %35 = arith.subf %34, %17 : vector<1x256xf32>
    %cst_11 = arith.constant 1.000000e+00 : f32
    %36 = vector.broadcast %cst_11 : f32 to vector<1x256xf32>
    %37 = arith.subf %36, %18 : vector<1x256xf32>
    %38 = arith.mulf %35, %37 : vector<1x256xf32>
    %c0_i32 = arith.constant 0 : i32
    %39 = vector.broadcast %c0_i32 : i32 to vector<1x256xi32>
    %40 = arith.cmpi sge, %19, %39 : vector<1x256xi32>
    %c15_i32 = arith.constant 15 : i32
    %41 = vector.broadcast %c15_i32 : i32 to vector<1x256xi32>
    %42 = arith.cmpi sle, %19, %41 : vector<1x256xi32>
    %43 = arith.andi %40, %42 : vector<1x256xi1>
    %c0_i32_12 = arith.constant 0 : i32
    %44 = vector.broadcast %c0_i32_12 : i32 to vector<1x256xi32>
    %45 = arith.cmpi sge, %20, %44 : vector<1x256xi32>
    %46 = arith.andi %43, %45 : vector<1x256xi1>
    %c15_i32_13 = arith.constant 15 : i32
    %47 = vector.broadcast %c15_i32_13 : i32 to vector<1x256xi32>
    %48 = arith.cmpi sle, %20, %47 : vector<1x256xi32>
    %49 = arith.andi %46, %48 : vector<1x256xi1>
    %cst_14 = arith.constant 0.000000e+00 : f32
    %50 = vector.broadcast %cst_14 : f32 to vector<1x256xf32>
    %51 = arith.select %49, %38, %50 : vector<1x256xi1>, vector<1x256xf32>
    %52 = vector.broadcast %51 : vector<1x256xf32> to vector<4x256xf32>
    %53 = arith.mulf %33, %52 : vector<4x256xf32>
    %c16_i32_15 = arith.constant 16 : i32
    %54 = vector.broadcast %c16_i32_15 : i32 to vector<1x256xi32>
    %55 = arith.muli %20, %54 : vector<1x256xi32>
    %56 = arith.addi %55, %22 : vector<1x256xi32>
    %57 = vector.broadcast %56 : vector<1x256xi32> to vector<256x256xi32>
    %58 = arith.cmpi eq, %25, %57 : vector<256x256xi32>
    %59 = arith.extui %58 : vector<256x256xi1> to vector<256x256xi32>
    %60 = arith.sitofp %59 : vector<256x256xi32> to vector<256x256xf32>
    %cst_16 = arith.constant dense<0.000000e+00> : vector<4x256xf32>
    %61 = tpu.matmul %1, %60, %cst_16 {dimension_numbers = #tpu.dot_dimension_numbers<[1], [0], [0], [1], [0, 0, 1, 1], [], []>} : vector<4x256xf32>, vector<256x256xf32>, vector<4x256xf32> -> vector<4x256xf32>
    %cst_17 = arith.constant 1.000000e+00 : f32
    %62 = vector.broadcast %cst_17 : f32 to vector<1x256xf32>
    %63 = arith.subf %62, %18 : vector<1x256xf32>
    %64 = arith.mulf %17, %63 : vector<1x256xf32>
    %c0_i32_18 = arith.constant 0 : i32
    %65 = vector.broadcast %c0_i32_18 : i32 to vector<1x256xi32>
    %66 = arith.cmpi sge, %22, %65 : vector<1x256xi32>
    %c15_i32_19 = arith.constant 15 : i32
    %67 = vector.broadcast %c15_i32_19 : i32 to vector<1x256xi32>
    %68 = arith.cmpi sle, %22, %67 : vector<1x256xi32>
    %69 = arith.andi %66, %68 : vector<1x256xi1>
    %c0_i32_20 = arith.constant 0 : i32
    %70 = vector.broadcast %c0_i32_20 : i32 to vector<1x256xi32>
    %71 = arith.cmpi sge, %20, %70 : vector<1x256xi32>
    %72 = arith.andi %69, %71 : vector<1x256xi1>
    %c15_i32_21 = arith.constant 15 : i32
    %73 = vector.broadcast %c15_i32_21 : i32 to vector<1x256xi32>
    %74 = arith.cmpi sle, %20, %73 : vector<1x256xi32>
    %75 = arith.andi %72, %74 : vector<1x256xi1>
    %cst_22 = arith.constant 0.000000e+00 : f32
    %76 = vector.broadcast %cst_22 : f32 to vector<1x256xf32>
    %77 = arith.select %75, %64, %76 : vector<1x256xi1>, vector<1x256xf32>
    %78 = vector.broadcast %77 : vector<1x256xf32> to vector<4x256xf32>
    %79 = arith.mulf %61, %78 : vector<4x256xf32>
    %80 = arith.addf %53, %79 : vector<4x256xf32>
    %c16_i32_23 = arith.constant 16 : i32
    %81 = vector.broadcast %c16_i32_23 : i32 to vector<1x256xi32>
    %82 = arith.muli %24, %81 : vector<1x256xi32>
    %83 = arith.addi %82, %19 : vector<1x256xi32>
    %84 = vector.broadcast %83 : vector<1x256xi32> to vector<256x256xi32>
    %85 = arith.cmpi eq, %25, %84 : vector<256x256xi32>
    %86 = arith.extui %85 : vector<256x256xi1> to vector<256x256xi32>
    %87 = arith.sitofp %86 : vector<256x256xi32> to vector<256x256xf32>
    %cst_24 = arith.constant dense<0.000000e+00> : vector<4x256xf32>
    %88 = tpu.matmul %1, %87, %cst_24 {dimension_numbers = #tpu.dot_dimension_numbers<[1], [0], [0], [1], [0, 0, 1, 1], [], []>} : vector<4x256xf32>, vector<256x256xf32>, vector<4x256xf32> -> vector<4x256xf32>
    %cst_25 = arith.constant 1.000000e+00 : f32
    %89 = vector.broadcast %cst_25 : f32 to vector<1x256xf32>
    %90 = arith.subf %89, %17 : vector<1x256xf32>
    %91 = arith.mulf %90, %18 : vector<1x256xf32>
    %c0_i32_26 = arith.constant 0 : i32
    %92 = vector.broadcast %c0_i32_26 : i32 to vector<1x256xi32>
    %93 = arith.cmpi sge, %19, %92 : vector<1x256xi32>
    %c15_i32_27 = arith.constant 15 : i32
    %94 = vector.broadcast %c15_i32_27 : i32 to vector<1x256xi32>
    %95 = arith.cmpi sle, %19, %94 : vector<1x256xi32>
    %96 = arith.andi %93, %95 : vector<1x256xi1>
    %c0_i32_28 = arith.constant 0 : i32
    %97 = vector.broadcast %c0_i32_28 : i32 to vector<1x256xi32>
    %98 = arith.cmpi sge, %24, %97 : vector<1x256xi32>
    %99 = arith.andi %96, %98 : vector<1x256xi1>
    %c15_i32_29 = arith.constant 15 : i32
    %100 = vector.broadcast %c15_i32_29 : i32 to vector<1x256xi32>
    %101 = arith.cmpi sle, %24, %100 : vector<1x256xi32>
    %102 = arith.andi %99, %101 : vector<1x256xi1>
    %cst_30 = arith.constant 0.000000e+00 : f32
    %103 = vector.broadcast %cst_30 : f32 to vector<1x256xf32>
    %104 = arith.select %102, %91, %103 : vector<1x256xi1>, vector<1x256xf32>
    %105 = vector.broadcast %104 : vector<1x256xf32> to vector<4x256xf32>
    %106 = arith.mulf %88, %105 : vector<4x256xf32>
    %107 = arith.addf %80, %106 : vector<4x256xf32>
    %c16_i32_31 = arith.constant 16 : i32
    %108 = vector.broadcast %c16_i32_31 : i32 to vector<1x256xi32>
    %109 = arith.muli %24, %108 : vector<1x256xi32>
    %110 = arith.addi %109, %22 : vector<1x256xi32>
    %111 = vector.broadcast %110 : vector<1x256xi32> to vector<256x256xi32>
    %112 = arith.cmpi eq, %25, %111 : vector<256x256xi32>
    %113 = arith.extui %112 : vector<256x256xi1> to vector<256x256xi32>
    %114 = arith.sitofp %113 : vector<256x256xi32> to vector<256x256xf32>
    %cst_32 = arith.constant dense<0.000000e+00> : vector<4x256xf32>
    %115 = tpu.matmul %1, %114, %cst_32 {dimension_numbers = #tpu.dot_dimension_numbers<[1], [0], [0], [1], [0, 0, 1, 1], [], []>} : vector<4x256xf32>, vector<256x256xf32>, vector<4x256xf32> -> vector<4x256xf32>
    %116 = arith.mulf %17, %18 : vector<1x256xf32>
    %c0_i32_33 = arith.constant 0 : i32
    %117 = vector.broadcast %c0_i32_33 : i32 to vector<1x256xi32>
    %118 = arith.cmpi sge, %22, %117 : vector<1x256xi32>
    %c15_i32_34 = arith.constant 15 : i32
    %119 = vector.broadcast %c15_i32_34 : i32 to vector<1x256xi32>
    %120 = arith.cmpi sle, %22, %119 : vector<1x256xi32>
    %121 = arith.andi %118, %120 : vector<1x256xi1>
    %c0_i32_35 = arith.constant 0 : i32
    %122 = vector.broadcast %c0_i32_35 : i32 to vector<1x256xi32>
    %123 = arith.cmpi sge, %24, %122 : vector<1x256xi32>
    %124 = arith.andi %121, %123 : vector<1x256xi1>
    %c15_i32_36 = arith.constant 15 : i32
    %125 = vector.broadcast %c15_i32_36 : i32 to vector<1x256xi32>
    %126 = arith.cmpi sle, %24, %125 : vector<1x256xi32>
    %127 = arith.andi %124, %126 : vector<1x256xi1>
    %cst_37 = arith.constant 0.000000e+00 : f32
    %128 = vector.broadcast %cst_37 : f32 to vector<1x256xf32>
    %129 = arith.select %127, %116, %128 : vector<1x256xi1>, vector<1x256xf32>
    %130 = vector.broadcast %129 : vector<1x256xf32> to vector<4x256xf32>
    %131 = arith.mulf %115, %130 : vector<4x256xf32>
    %132 = arith.addf %107, %131 : vector<4x256xf32>
    %c0_38 = arith.constant 0 : index
    %c0_39 = arith.constant 0 : index
    %c0_40 = arith.constant 0 : index
    %133 = vector.load %arg5[%c0_38, %c0_39, %c0_40] : memref<1x4x256xf32, #tpu.memory_space<vmem>>, vector<1x4x256xf32>
    %134 = vector.shape_cast %133 : vector<1x4x256xf32> to vector<4x256xf32>
    %135 = vector.shape_cast %132 : vector<4x256xf32> to vector<1x4x256xf32>
    tpu.vector_store %arg5[%c0_38, %c0_39, %c0_40], %135 {strides = array<i32>} : memref<1x4x256xf32, #tpu.memory_space<vmem>>, vector<1x4x256xf32>,
    return
  }
  func.func @transform_0(%arg0: i32, %arg1: i32) -> (i32, i32) {
    %c0_i32 = arith.constant 0 : i32
    %c0_i32_0 = arith.constant 0 : i32
    return %c0_i32, %arg1 : i32, i32
  }
  func.func @transform_1(%arg0: i32, %arg1: i32) -> (i32, i32, i32) {
    %c0_i32 = arith.constant 0 : i32
    %c0_i32_0 = arith.constant 0 : i32
    %c0_i32_1 = arith.constant 0 : i32
    return %arg0, %c0_i32, %c0_i32_0 : i32, i32, i32
  }
  func.func @transform_2(%arg0: i32, %arg1: i32) -> (i32, i32, i32) {
    %c0_i32 = arith.constant 0 : i32
    %c0_i32_0 = arith.constant 0 : i32
    return %arg0, %c0_i32, %arg1 : i32, i32, i32
  }
  func.func @transform_3(%arg0: i32, %arg1: i32) -> (i32, i32, i32) {
    %c0_i32 = arith.constant 0 : i32
    %c0_i32_0 = arith.constant 0 : i32
    return %arg0, %c0_i32, %arg1 : i32, i32, i32
  }
}

</mosaic_0001>

<llo_original>
// kernel: tpu_custom_call.1
$region0: #{tpu_custom_call.1}
  #allocation0 [shape = 'u32[]', space=smem, size = 0x4, offset = 0x4, fixed_abs, tag = 'smem constant byte address 0x4 - core index']
  #allocation1 [shape = 'u32[72,128]{1,0:T(1,128)}', space=vmem, size = 0x9000, scoped, tag = 'internal scratch']
  %s0 = inlined_call_operand.hbm [shape: f32[2,256], index: 0, kind: input, shape index: {}]
  %s1 = inlined_call_operand.hbm [shape: f32[2,4,256], index: 1, kind: input, shape index: {}]
  %s2 = inlined_call_operand.hbm [shape: f32[2,2,256], index: 2, kind: input, shape index: {}]
  %s3 = inlined_call_operand.hbm [shape: f32[2,4,256], index: 3, kind: output, shape index: {}]
  %s4 = sld [smem:[#allocation0]]
  $region57: #{tpu_custom_call.1} parent=0
    _
  %s6 = ssub.s32 1, %s4
  %s7 = scalar_select 0, %s6, %s4
  $region1: #{tpu_custom_call.1} parent=0
    #allocation2 [shape = 'u8[2048]{0}', space=vmem, size = 0x800, scoped, tag = 'input window, operand 0, single buffered']
    #allocation3 [shape = 's32[2]{0}', space=sflag, size = 0x8, scoped, tag = 'scoped memory for tpu_custom_call.1']
    #allocation4 [shape = 's32[2]{0}', space=sflag, size = 0x8, scoped, tag = 'scoped memory for tpu_custom_call.1']
    #allocation5 [shape = 'u8[8192]{0}', space=vmem, size = 0x2000, scoped, tag = 'input window, operand 1']
    #allocation6 [shape = 's32[2]{0}', space=sflag, size = 0x8, scoped, tag = 'scoped memory for tpu_custom_call.1']
    #allocation7 [shape = 'u8[4096]{0}', space=vmem, size = 0x1000, scoped, tag = 'input window, operand 2']
    #allocation8 [shape = 'u8[8192]{0}', space=vmem, size = 0x2000, scoped, tag = 'output window, operand 0']
    %8 = vsyncpa [#allocation3], 0
    %9 = vsyncpa [#allocation6], 0
    %s10 = scalar_lea.sflag [#allocation6], 1
    %11 = vsyncpa %s10, 0
    %12 = vsyncpa [#allocation4], 0
    %s13 = scalar_lea.sflag [#allocation4], 1
    %14 = vsyncpa %s13, 0
    loop: start=0, step=1, limit=4
    $region2: #{tpu_custom_call.1} parent=1 // loop_pre_header
      _
    $region3: #{tpu_custom_call.1} parent=1 // loop_header
      %s16 = sphi 0, %s20
      %p17 = scmp.ge.s32.totalorder %s16, 4
      %s23 = sphi 0, %s35
      %s24 = sphi 0, %s31
      %s25 = sphi 0, %s23
      %s26 = sphi 0, %s24
      %s27 = sphi 0, %s25
      %s28 = sphi 0, %s26
      %s38 = sphi 0, %s40
      %s41 = sphi 0, %s38
      %s42 = sphi 0, %s41
      %s58 = sphi 0, %s42
      %s64 = sphi 0, %s66
      %s67 = sphi 0, %s64
      %s68 = sphi 0, %s67
      %s84 = sphi 0, %s68
      %s92 = sphi 0, %s94
      %s95 = sphi 0, %s92
      %s96 = sphi 0, %s95
      %s112 = sphi 0, %s96
      %s120 = sphi 0, %s122
      %s123 = sphi 0, %s120
      %s124 = sphi 0, %s123
      %s140 = sphi 0, %s124
    $region4: #{tpu_custom_call.1} parent=1 // loop_header_branch
      %19 = sbr.rel (%p17) target = $region8
    $region5: #{tpu_custom_call.1} parent=1 // loop_body
      %s21 = ssub.s32 %s16, 1
      %s22 = ssub.s32 %s16, 2
      %s29 = sadd.s32 1, %s24
      %p30 = scmp.ge.s32.totalorder %s29, 1
      %s31 = scalar_select %p30, 0, %s29
      %s32 = sadd.s32 1, %s23
      %s33 = scalar_select %p30, %s32, %s23
      %p34 = scmp.ge.s32.totalorder %s33, 2
      %s35 = scalar_select %p34, 0, %s33
      %s36 = ssub.s32 %s24, %s31
      %p37 = scmp.eq.s32.totalorder %s36, 0
      %s39 = sadd.s32 %s38, 1
      %s40 = scalar_select %p37, %s38, %s39
      %p43 = pneg %p37
      %p44 = scmp.eq.s32.totalorder %s16, 1
      %p45 = por %p43, %p44
      %p46 = scmp.ne.s32.totalorder %s38, %s41
      %p47 = scmp.eq.s32.totalorder %s16, 0
      %p48 = por %p46, %p47
      %p49 = scmp.ne.s32.totalorder %s38, %s41
      %p50 = scmp.eq.s32.totalorder %s21, 1
      %p51 = por %p49, %p50
      %p52 = scmp.ne.s32.totalorder %s41, %s42
      %p53 = scmp.eq.s32.totalorder %s21, 0
      %p54 = por %p52, %p53
      %p55 = scmp.ne.s32.totalorder %s41, %s42
      %p56 = scmp.eq.s32.totalorder %s22, 1
      %p57 = por %p55, %p56
      %p59 = scmp.ne.s32.totalorder %s42, %s58
      %p60 = scmp.eq.s32.totalorder %s22, 0
      %p61 = por %p59, %p60
      %s62 = ssub.s32 %s23, %s35
      %p63 = scmp.eq.s32.totalorder %s62, 0
      %s65 = sadd.s32 %s64, 1
      %s66 = scalar_select %p63, %s64, %s65
      %p69 = pneg %p63
      %p70 = scmp.eq.s32.totalorder %s16, 1
      %p71 = por %p69, %p70
      %p72 = scmp.ne.s32.totalorder %s64, %s67
      %p73 = scmp.eq.s32.totalorder %s16, 0
      %p74 = por %p72, %p73
      %p75 = scmp.ne.s32.totalorder %s64, %s67
      %p76 = scmp.eq.s32.totalorder %s21, 1
      %p77 = por %p75, %p76
      %p78 = scmp.ne.s32.totalorder %s67, %s68
      %p79 = scmp.eq.s32.totalorder %s21, 0
      %p80 = por %p78, %p79
      %p81 = scmp.ne.s32.totalorder %s67, %s68
      %p82 = scmp.eq.s32.totalorder %s22, 1
      %p83 = por %p81, %p82
      %p85 = scmp.ne.s32.totalorder %s68, %s84
      %p86 = scmp.eq.s32.totalorder %s22, 0
      %p87 = por %p85, %p86
      %s88 = ssub.s32 %s23, %s35
      %s89 = ssub.s32 %s24, %s31
      %s90 = sor.u32 %s88, %s89
      %p91 = scmp.eq.s32.totalorder %s90, 0
      %s93 = sadd.s32 %s92, 1
      %s94 = scalar_select %p91, %s92, %s93
      %p97 = pneg %p91
      %p98 = scmp.eq.s32.totalorder %s16, 1
      %p99 = por %p97, %p98
      %p100 = scmp.ne.s32.totalorder %s92, %s95
      %p101 = scmp.eq.s32.totalorder %s16, 0
      %p102 = por %p100, %p101
      %p103 = scmp.ne.s32.totalorder %s92, %s95
      %p104 = scmp.eq.s32.totalorder %s21, 1
      %p105 = por %p103, %p104
      %p106 = scmp.ne.s32.totalorder %s95, %s96
      %p107 = scmp.eq.s32.totalorder %s21, 0
      %p108 = por %p106, %p107
      %p109 = scmp.ne.s32.totalorder %s95, %s96
      %p110 = scmp.eq.s32.totalorder %s22, 1
      %p111 = por %p109, %p110
      %p113 = scmp.ne.s32.totalorder %s96, %s112
      %p114 = scmp.eq.s32.totalorder %s22, 0
      %p115 = por %p113, %p114
      %s116 = ssub.s32 %s23, %s35
      %s117 = ssub.s32 %s24, %s31
      %s118 = sor.u32 %s116, %s117
      %p119 = scmp.eq.s32.totalorder %s118, 0
      %s121 = sadd.s32 %s120, 1
      %s122 = scalar_select %p119, %s120, %s121
      %p125 = pneg %p119
      %p126 = scmp.eq.s32.totalorder %s16, 1
      %p127 = por %p125, %p126
      %p128 = scmp.ne.s32.totalorder %s120, %s123
      %p129 = scmp.eq.s32.totalorder %s16, 0
      %p130 = por %p128, %p129
      %p131 = scmp.ne.s32.totalorder %s120, %s123
      %p132 = scmp.eq.s32.totalorder %s21, 1
      %p133 = por %p131, %p132
      %p134 = scmp.ne.s32.totalorder %s123, %s124
      %p135 = scmp.eq.s32.totalorder %s21, 0
      %p136 = por %p134, %p135
      %p137 = scmp.ne.s32.totalorder %s123, %s124
      %p138 = scmp.eq.s32.totalorder %s22, 1
      %p139 = por %p137, %p138
      %p141 = scmp.ne.s32.totalorder %s124, %s140
      %p142 = scmp.eq.s32.totalorder %s22, 0
      %p143 = por %p141, %p142
      %p144 = scmp.le.s32.totalorder 1, %s16
      %p145 = scmp.lt.s32.totalorder %s16, 3
      %p146 = pnand %p144, %p145
      %p147 = pneg %p146
      // Predicated region
      $region9: #{tpu_custom_call.1} parent=5 // pred_check
        _
      $region10: #{tpu_custom_call.1} parent=5 // pred_check_branch
        %149 = sbr.rel (%p146) target = $region12
      $region11: #{tpu_custom_call.1} parent=5 // pred_region
        %s150 = ssub.s32 %s16, 1
        // Predicated region
        $region13: #{tpu_custom_call.1} parent=11 // pred_check
          %p151 = pneg %p54
        $region14: #{tpu_custom_call.1} parent=11 // pred_check_branch
          %153 = sbr.rel (%p151) target = $region16
        $region15: #{tpu_custom_call.1} parent=11 // pred_region
          %s154 = smul.u32 2, %s26
          %156 = vsyncadd [#allocation3], 0
          %s157 = smul.addr %s154, 2
          %s158 = scalar_lea.hbm %s0, %s157
          %s160 = sshll.u32 %s158, 4
          %s161 = int_to_ptr.hbm [resolvable:$true] %s160
          %s162 = sshll.u32 [#allocation2], 4
          %s163 = int_to_ptr.vmem [resolvable:$true] %s162
          %165 = dma.hbm_to_vmem [thread:$0]  %s161, 64, %s163, [#allocation3]
        $region16: #{tpu_custom_call.1} parent=11 // pred_fallthru
          _
      $region12: #{tpu_custom_call.1} parent=5 // pred_fallthru
        _
      %p166 = scmp.lt.s32.totalorder %s16, 2
      // Predicated region
      $region17: #{tpu_custom_call.1} parent=5 // pred_check
        %p167 = pneg %p166
      $region18: #{tpu_custom_call.1} parent=5 // pred_check_branch
        %169 = sbr.rel (%p167) target = $region20
      $region19: #{tpu_custom_call.1} parent=5 // pred_region
        // Predicated region
        $region21: #{tpu_custom_call.1} parent=19 // pred_check
          %p170 = pneg %p74
        $region22: #{tpu_custom_call.1} parent=19 // pred_check_branch
          %172 = sbr.rel (%p170) target = $region24
        $region23: #{tpu_custom_call.1} parent=19 // pred_region
          %s173 = sand.u32 %s16, 1
          %s174 = scalar_lea.sflag [#allocation6], %s173
          %s175 = sand.u32 %s64, 1
          %s176 = smul.addr %s175, 8
          %s177 = scalar_lea.vmem [#allocation5], %s176
          %179 = vsyncadd %s174, 0
          %s180 = smul.addr %s23, 2
          %s181 = smul.addr %s180, 4
          %s182 = scalar_lea.hbm %s1, %s181
          %s184 = sshll.u32 %s182, 4
          %s185 = int_to_ptr.hbm [resolvable:$true] %s184
          %s186 = sshll.u32 %s177, 4
          %s187 = int_to_ptr.vmem [resolvable:$true] %s186
          %189 = dma.hbm_to_vmem [thread:$0]  %s185, 128, %s187, %s174
        $region24: #{tpu_custom_call.1} parent=19 // pred_fallthru
          _
        // Predicated region
        $region25: #{tpu_custom_call.1} parent=19 // pred_check
          %p190 = pneg %p102
        $region26: #{tpu_custom_call.1} parent=19 // pred_check_branch
          %192 = sbr.rel (%p190) target = $region28
        $region27: #{tpu_custom_call.1} parent=19 // pred_region
          %s193 = sand.u32 %s16, 1
          %s194 = scalar_lea.sflag [#allocation6], %s193
          %s195 = sand.u32 %s92, 1
          %s196 = smul.addr %s195, 4
          %s197 = scalar_lea.vmem [#allocation7], %s196
          %s198 = smul.u32 2, %s24
          %200 = vsyncadd %s194, 0
          %s201 = smul.addr %s23, 2
          %s202 = sadd.s32 %s198, %s201
          %s203 = smul.addr %s202, 2
          %s204 = scalar_lea.hbm %s2, %s203
          %s206 = sshll.u32 %s204, 4
          %s207 = int_to_ptr.hbm [resolvable:$true] %s206
          %s208 = sshll.u32 %s197, 4
          %s209 = int_to_ptr.vmem [resolvable:$true] %s208
          %211 = dma.hbm_to_vmem [thread:$0]  %s207, 64, %s209, %s194
        $region28: #{tpu_custom_call.1} parent=19 // pred_fallthru
          _
      $region20: #{tpu_custom_call.1} parent=5 // pred_fallthru
        _
      %p212 = scmp.le.s32.totalorder 1, %s16
      %p213 = scmp.lt.s32.totalorder %s16, 3
      %p214 = pnand %p212, %p213
      %p215 = pneg %p214
      // Predicated region
      $region29: #{tpu_custom_call.1} parent=5 // pred_check
        _
      $region30: #{tpu_custom_call.1} parent=5 // pred_check_branch
        %217 = sbr.rel (%p214) target = $region32
      $region31: #{tpu_custom_call.1} parent=5 // pred_region
        %s218 = ssub.s32 %s16, 1
        // Predicated region
        $region33: #{tpu_custom_call.1} parent=31 // pred_check
          %p219 = pneg %p54
        $region34: #{tpu_custom_call.1} parent=31 // pred_check_branch
          %221 = sbr.rel (%p219) target = $region36
        $region35: #{tpu_custom_call.1} parent=31 // pred_region
          %223 = dma.done [#allocation3], 64
        $region36: #{tpu_custom_call.1} parent=31 // pred_fallthru
          _
        %s224 = sand.u32 %s21, 1
        %s225 = scalar_lea.sflag [#allocation6], %s224
        %s226 = sand.u32 %s67, 1
        %s227 = smul.addr %s226, 8
        %s228 = scalar_lea.vmem [#allocation5], %s227
        // Predicated region
        $region37: #{tpu_custom_call.1} parent=31 // pred_check
          %p229 = pneg %p80
        $region38: #{tpu_custom_call.1} parent=31 // pred_check_branch
          %231 = sbr.rel (%p229) target = $region40
        $region39: #{tpu_custom_call.1} parent=31 // pred_region
          %233 = dma.done %s225, 128
        $region40: #{tpu_custom_call.1} parent=31 // pred_fallthru
          _
        %s234 = sand.u32 %s21, 1
        %s235 = scalar_lea.sflag [#allocation6], %s234
        %s236 = sand.u32 %s95, 1
        %s237 = smul.addr %s236, 4
        %s238 = scalar_lea.vmem [#allocation7], %s237
        // Predicated region
        $region41: #{tpu_custom_call.1} parent=31 // pred_check
          %p239 = pneg %p108
        $region42: #{tpu_custom_call.1} parent=31 // pred_check_branch
          %241 = sbr.rel (%p239) target = $region44
        $region43: #{tpu_custom_call.1} parent=31 // pred_region
          %243 = dma.done %s235, 64
        $region44: #{tpu_custom_call.1} parent=31 // pred_fallthru
          _
        %p244 = pneg %p54
        %p245 = pneg %p51
        %s246 = sand.u32 %s21, 1
        %s247 = scalar_lea.sflag [#allocation6], %s246
        %s248 = sand.u32 %s67, 1
        %s249 = smul.addr %s248, 8
        %s250 = scalar_lea.vmem [#allocation5], %s249
        %p251 = pneg %p80
        %p252 = pneg %p77
        %s253 = sand.u32 %s21, 1
        %s254 = scalar_lea.sflag [#allocation6], %s253
        %s255 = sand.u32 %s95, 1
        %s256 = smul.addr %s255, 4
        %s257 = scalar_lea.vmem [#allocation7], %s256
        %p258 = pneg %p108
        %p259 = pneg %p105
        %p260 = pneg %p136
        %p261 = pneg %p133
        %s262 = sand.u32 %s123, 1
        %s263 = scalar_lea.sflag [#allocation4], %s262
        %s264 = sand.u32 %s123, 1
        %s265 = smul.addr %s264, 8
        %s266 = scalar_lea.vmem [#allocation8], %s265
        %s267 = smul.u32 2, %s26
        %s268 = smul.u32 2, %s26
        %s269 = smul.u32 2, %s26
        %v270 = vld [vmem:[%s228] sm:$0xff]
        %v271 = vld [vmem:[#allocation2] sm:$0xf]
        %v272 = vld [vmem:[%s238] sm:$0xf]
        %v273 = vadd.f32 %v271, %v272
        %v274 = vsub.f32 %v273, 0.5
        %v275 = vfloor.f32 %v274
        %v276 = vsub.f32 %v274, %v275
        %v277 = vcvt.f32.s32.to.zero.pseudo %v275
        %v278 = vadd.s32 %v277, 1
        %v279 = vlaneseq
        %v280 = vshrl.u32 %v279, 7
        %v281 = vadd.s32 %v280, 8
        %v282 = vadd.s32 %v280, 16
        %v283 = vadd.s32 %v280, 24
        %v284 = vadd.s32 %v280, 32
        %v285 = vadd.s32 %v280, 40
        %v286 = vadd.s32 %v280, 48
        %v287 = vadd.s32 %v280, 56
        %v288 = vadd.s32 %v280, 64
        %v289 = vadd.s32 %v280, 72
        %v290 = vadd.s32 %v280, 80
        %v291 = vadd.s32 %v280, 88
        %v292 = vadd.s32 %v280, 96
        %v293 = vadd.s32 %v280, 104
        %v294 = vadd.s32 %v280, 112
        %v295 = vadd.s32 %v280, 120
        %v296 = vadd.s32 %v280, 128
        %v297 = vadd.s32 %v280, 136
        %v298 = vadd.s32 %v280, 144
        %v299 = vadd.s32 %v280, 152
        %v300 = vadd.s32 %v280, 160
        %v301 = vadd.s32 %v280, 168
        %v302 = vadd.s32 %v280, 176
        %v303 = vadd.s32 %v280, 184
        %v304 = vadd.s32 %v280, 192
        %v305 = vadd.s32 %v280, 200
        %v306 = vadd.s32 %v280, 208
        %v307 = vadd.s32 %v280, 216
        %v308 = vadd.s32 %v280, 224
        %v309 = vadd.s32 %v280, 232
        %v310 = vadd.s32 %v280, 240
        %v311 = vadd.s32 %v280, 248
        %v312 = vmul.u32 %v277, 16
        %v313 = vrot.slane %v277, 7
        %v314 = vadd.s32 %v312, %v313
        %v315 = vperm.slane %v314, 1
        %v316 = vperm.slane %v314, 3
        %v317 = vperm.slane %v315, 1
        %v318 = vperm.slane %v316, 1
        %vm319 = vcmp.eq.s32.totalorder %v280, %v317
        %vm320 = vcmp.eq.s32.totalorder %v280, %v318
        %vm321 = vcmp.eq.s32.totalorder %v281, %v317
        %vm322 = vcmp.eq.s32.totalorder %v281, %v318
        %vm323 = vcmp.eq.s32.totalorder %v282, %v317
        %vm324 = vcmp.eq.s32.totalorder %v282, %v318
        %vm325 = vcmp.eq.s32.totalorder %v283, %v317
        %vm326 = vcmp.eq.s32.totalorder %v283, %v318
        %vm327 = vcmp.eq.s32.totalorder %v284, %v317
        %vm328 = vcmp.eq.s32.totalorder %v284, %v318
        %vm329 = vcmp.eq.s32.totalorder %v285, %v317
        %vm330 = vcmp.eq.s32.totalorder %v285, %v318
        %vm331 = vcmp.eq.s32.totalorder %v286, %v317
        %vm332 = vcmp.eq.s32.totalorder %v286, %v318
        %vm333 = vcmp.eq.s32.totalorder %v287, %v317
        %vm334 = vcmp.eq.s32.totalorder %v287, %v318
        %vm335 = vcmp.eq.s32.totalorder %v288, %v317
        %vm336 = vcmp.eq.s32.totalorder %v288, %v318
        %vm337 = vcmp.eq.s32.totalorder %v289, %v317
        %vm338 = vcmp.eq.s32.totalorder %v289, %v318
        %vm339 = vcmp.eq.s32.totalorder %v290, %v317
        %vm340 = vcmp.eq.s32.totalorder %v290, %v318
        %vm341 = vcmp.eq.s32.totalorder %v291, %v317
        %vm342 = vcmp.eq.s32.totalorder %v291, %v318
        %vm343 = vcmp.eq.s32.totalorder %v292, %v317
        %vm344 = vcmp.eq.s32.totalorder %v292, %v318
        %vm345 = vcmp.eq.s32.totalorder %v293, %v317
        %vm346 = vcmp.eq.s32.totalorder %v293, %v318
        %vm347 = vcmp.eq.s32.totalorder %v294, %v317
        %vm348 = vcmp.eq.s32.totalorder %v294, %v318
        %vm349 = vcmp.eq.s32.totalorder %v295, %v317
        %vm350 = vcmp.eq.s32.totalorder %v295, %v318
        %vm351 = vcmp.eq.s32.totalorder %v296, %v317
        %vm352 = vcmp.eq.s32.totalorder %v296, %v318
        %vm353 = vcmp.eq.s32.totalorder %v297, %v317
        %vm354 = vcmp.eq.s32.totalorder %v297, %v318
        %vm355 = vcmp.eq.s32.totalorder %v298, %v317
        %vm356 = vcmp.eq.s32.totalorder %v298, %v318
        %vm357 = vcmp.eq.s32.totalorder %v299, %v317
        %vm358 = vcmp.eq.s32.totalorder %v299, %v318
        %vm359 = vcmp.eq.s32.totalorder %v300, %v317
        %vm360 = vcmp.eq.s32.totalorder %v300, %v318
        %vm361 = vcmp.eq.s32.totalorder %v301, %v317
        %vm362 = vcmp.eq.s32.totalorder %v301, %v318
        %vm363 = vcmp.eq.s32.totalorder %v302, %v317
        %vm364 = vcmp.eq.s32.totalorder %v302, %v318
        %vm365 = vcmp.eq.s32.totalorder %v303, %v317
        %vm366 = vcmp.eq.s32.totalorder %v303, %v318
        %vm367 = vcmp.eq.s32.totalorder %v304, %v317
        %vm368 = vcmp.eq.s32.totalorder %v304, %v318
        %vm369 = vcmp.eq.s32.totalorder %v305, %v317
        %vm370 = vcmp.eq.s32.totalorder %v305, %v318
        %vm371 = vcmp.eq.s32.totalorder %v306, %v317
        %vm372 = vcmp.eq.s32.totalorder %v306, %v318
        %vm373 = vcmp.eq.s32.totalorder %v307, %v317
        %vm374 = vcmp.eq.s32.totalorder %v307, %v318
        %vm375 = vcmp.eq.s32.totalorder %v308, %v317
        %vm376 = vcmp.eq.s32.totalorder %v308, %v318
        %vm377 = vcmp.eq.s32.totalorder %v309, %v317
        %vm378 = vcmp.eq.s32.totalorder %v309, %v318
        %vm379 = vcmp.eq.s32.totalorder %v310, %v317
        %vm380 = vcmp.eq.s32.totalorder %v310, %v318
        %vm381 = vcmp.eq.s32.totalorder %v311, %v317
        %vm382 = vcmp.eq.s32.totalorder %v311, %v318
        %v383 = vsel %vm319, 1, 0
        %v384 = vsel %vm320, 1, 0
        %v385 = vsel %vm321, 1, 0
        %v386 = vsel %vm322, 1, 0
        %v387 = vsel %vm323, 1, 0
        %v388 = vsel %vm324, 1, 0
        %v389 = vsel %vm325, 1, 0
        %v390 = vsel %vm326, 1, 0
        %v391 = vsel %vm327, 1, 0
        %v392 = vsel %vm328, 1, 0
        %v393 = vsel %vm329, 1, 0
        %v394 = vsel %vm330, 1, 0
        %v395 = vsel %vm331, 1, 0
        %v396 = vsel %vm332, 1, 0
        %v397 = vsel %vm333, 1, 0
        %v398 = vsel %vm334, 1, 0
        %v399 = vsel %vm335, 1, 0
        %v400 = vsel %vm336, 1, 0
        %v401 = vsel %vm337, 1, 0
        %v402 = vsel %vm338, 1, 0
        %v403 = vsel %vm339, 1, 0
        %v404 = vsel %vm340, 1, 0
        %v405 = vsel %vm341, 1, 0
        %v406 = vsel %vm342, 1, 0
        %v407 = vsel %vm343, 1, 0
        %v408 = vsel %vm344, 1, 0
        %v409 = vsel %vm345, 1, 0
        %v410 = vsel %vm346, 1, 0
        %v411 = vsel %vm347, 1, 0
        %v412 = vsel %vm348, 1, 0
        %v413 = vsel %vm349, 1, 0
        %v414 = vsel %vm350, 1, 0
        %v415 = vsel %vm351, 1, 0
        %v416 = vsel %vm352, 1, 0
        %v417 = vsel %vm353, 1, 0
        %v418 = vsel %vm354, 1, 0
        %v419 = vsel %vm355, 1, 0
        %v420 = vsel %vm356, 1, 0
        %v421 = vsel %vm357, 1, 0
        %v422 = vsel %vm358, 1, 0
        %v423 = vsel %vm359, 1, 0
        %v424 = vsel %vm360, 1, 0
        %v425 = vsel %vm361, 1, 0
        %v426 = vsel %vm362, 1, 0
        %v427 = vsel %vm363, 1, 0
        %v428 = vsel %vm364, 1, 0
        %v429 = vsel %vm365, 1, 0
        %v430 = vsel %vm366, 1, 0
        %v431 = vsel %vm367, 1, 0
        %v432 = vsel %vm368, 1, 0
        %v433 = vsel %vm369, 1, 0
        %v434 = vsel %vm370, 1, 0
        %v435 = vsel %vm371, 1, 0
        %v436 = vsel %vm372, 1, 0
        %v437 = vsel %vm373, 1, 0
        %v438 = vsel %vm374, 1, 0
        %v439 = vsel %vm375, 1, 0
        %v440 = vsel %vm376, 1, 0
        %v441 = vsel %vm377, 1, 0
        %v442 = vsel %vm378, 1, 0
        %v443 = vsel %vm379, 1, 0
        %v444 = vsel %vm380, 1, 0
        %v445 = vsel %vm381, 1, 0
        %v446 = vsel %vm382, 1, 0
        %v447 = vcvt.s32.f32 %v383
        %v448 = vcvt.s32.f32 %v384
        %v449 = vcvt.s32.f32 %v385
        %v450 = vcvt.s32.f32 %v386
        %v451 = vcvt.s32.f32 %v387
        %v452 = vcvt.s32.f32 %v388
        %v453 = vcvt.s32.f32 %v389
        %v454 = vcvt.s32.f32 %v390
        %v455 = vcvt.s32.f32 %v391
        %v456 = vcvt.s32.f32 %v392
        %v457 = vcvt.s32.f32 %v393
        %v458 = vcvt.s32.f32 %v394
        %v459 = vcvt.s32.f32 %v395
        %v460 = vcvt.s32.f32 %v396
        %v461 = vcvt.s32.f32 %v397
        %v462 = vcvt.s32.f32 %v398
        %v463 = vcvt.s32.f32 %v399
        %v464 = vcvt.s32.f32 %v400
        %v465 = vcvt.s32.f32 %v401
        %v466 = vcvt.s32.f32 %v402
        %v467 = vcvt.s32.f32 %v403
        %v468 = vcvt.s32.f32 %v404
        %v469 = vcvt.s32.f32 %v405
        %v470 = vcvt.s32.f32 %v406
        %v471 = vcvt.s32.f32 %v407
        %v472 = vcvt.s32.f32 %v408
        %v473 = vcvt.s32.f32 %v409
        %v474 = vcvt.s32.f32 %v410
        %v475 = vcvt.s32.f32 %v411
        %v476 = vcvt.s32.f32 %v412
        %v477 = vcvt.s32.f32 %v413
        %v478 = vcvt.s32.f32 %v414
        %v479 = vcvt.s32.f32 %v415
        %v480 = vcvt.s32.f32 %v416
        %v481 = vcvt.s32.f32 %v417
        %v482 = vcvt.s32.f32 %v418
        %v483 = vcvt.s32.f32 %v419
        %v484 = vcvt.s32.f32 %v420
        %v485 = vcvt.s32.f32 %v421
        %v486 = vcvt.s32.f32 %v422
        %v487 = vcvt.s32.f32 %v423
        %v488 = vcvt.s32.f32 %v424
        %v489 = vcvt.s32.f32 %v425
        %v490 = vcvt.s32.f32 %v426
        %v491 = vcvt.s32.f32 %v427
        %v492 = vcvt.s32.f32 %v428
        %v493 = vcvt.s32.f32 %v429
        %v494 = vcvt.s32.f32 %v430
        %v495 = vcvt.s32.f32 %v431
        %v496 = vcvt.s32.f32 %v432
        %v497 = vcvt.s32.f32 %v433
        %v498 = vcvt.s32.f32 %v434
        %v499 = vcvt.s32.f32 %v435
        %v500 = vcvt.s32.f32 %v436
        %v501 = vcvt.s32.f32 %v437
        %v502 = vcvt.s32.f32 %v438
        %v503 = vcvt.s32.f32 %v439
        %v504 = vcvt.s32.f32 %v440
        %v505 = vcvt.s32.f32 %v441
        %v506 = vcvt.s32.f32 %v442
        %v507 = vcvt.s32.f32 %v443
        %v508 = vcvt.s32.f32 %v444
        %v509 = vcvt.s32.f32 %v445
        %v510 = vcvt.s32.f32 %v446
        %512 = vst [vmem:[#allocation1] ss:$2 sm:$0xff] %v270
        %v513 = vld.sshfl [vmem:[#allocation1] sm:$0xff pattern:$0x75316420]
        %v514 = vld.sshfl [vmem:[#allocation1 + $0x8] sm:$0xff pattern:$0x75316420]
        %517 = vmatpush.msra.mxu0 %v477
        %518 = vmatpush.msra.mxu0 %v475
        %519 = vmatpush.msra.mxu0 %v473
        %520 = vmatpush.msra.mxu0 %v471
        %521 = vmatpush.msra.mxu0 %v469
        %522 = vmatpush.msra.mxu0 %v467
        %523 = vmatpush.msra.mxu0 %v465
        %524 = vmatpush.msra.mxu0 %v463
        %525 = vmatpush.msra.mxu0 %v461
        %526 = vmatpush.msra.mxu0 %v459
        %527 = vmatpush.msra.mxu0 %v457
        %528 = vmatpush.msra.mxu0 %v455
        %529 = vmatpush.msra.mxu0 %v453
        %530 = vmatpush.msra.mxu0 %v451
        %531 = vmatpush.msra.mxu0 %v449
        %532 = vmatpush.msra.mxu0 %v447
        %533 = vmatmul.f32.gmra.mxu0 %v513
        %v534 = vpop.f32.mrf.mxu0
        %v535 = vadd.f32 0.0, %v534
        %536 = vdwg.mxu0
        %537 = vmatpush.msra.mxu0 %v509
        %538 = vmatpush.msra.mxu0 %v507
        %539 = vmatpush.msra.mxu0 %v505
        %540 = vmatpush.msra.mxu0 %v503
        %541 = vmatpush.msra.mxu0 %v501
        %542 = vmatpush.msra.mxu0 %v499
        %543 = vmatpush.msra.mxu0 %v497
        %544 = vmatpush.msra.mxu0 %v495
        %545 = vmatpush.msra.mxu0 %v493
        %546 = vmatpush.msra.mxu0 %v491
        %547 = vmatpush.msra.mxu0 %v489
        %548 = vmatpush.msra.mxu0 %v487
        %549 = vmatpush.msra.mxu0 %v485
        %550 = vmatpush.msra.mxu0 %v483
        %551 = vmatpush.msra.mxu0 %v481
        %552 = vmatpush.msra.mxu0 %v479
        %553 = vmatmul.f32.gmra.mxu0 %v514
        %v554 = vpop.f32.mrf.mxu0
        %v555 = vadd.f32 %v535, %v554
        %556 = vdwg.mxu0
        %557 = vmatpush.msra.mxu0 %v478
        %558 = vmatpush.msra.mxu0 %v476
        %559 = vmatpush.msra.mxu0 %v474
        %560 = vmatpush.msra.mxu0 %v472
        %561 = vmatpush.msra.mxu0 %v470
        %562 = vmatpush.msra.mxu0 %v468
        %563 = vmatpush.msra.mxu0 %v466
        %564 = vmatpush.msra.mxu0 %v464
        %565 = vmatpush.msra.mxu0 %v462
        %566 = vmatpush.msra.mxu0 %v460
        %567 = vmatpush.msra.mxu0 %v458
        %568 = vmatpush.msra.mxu0 %v456
        %569 = vmatpush.msra.mxu0 %v454
        %570 = vmatpush.msra.mxu0 %v452
        %571 = vmatpush.msra.mxu0 %v450
        %572 = vmatpush.msra.mxu0 %v448
        %573 = vmatmul.f32.gmra.mxu0 %v513
        %v574 = vpop.f32.mrf.mxu0
        %v575 = vadd.f32 0.0, %v574
        %576 = vdwg.mxu0
        %577 = vmatpush.msra.mxu0 %v510
        %578 = vmatpush.msra.mxu0 %v508
        %579 = vmatpush.msra.mxu0 %v506
        %580 = vmatpush.msra.mxu0 %v504
        %581 = vmatpush.msra.mxu0 %v502
        %582 = vmatpush.msra.mxu0 %v500
        %583 = vmatpush.msra.mxu0 %v498
        %584 = vmatpush.msra.mxu0 %v496
        %585 = vmatpush.msra.mxu0 %v494
        %586 = vmatpush.msra.mxu0 %v492
        %587 = vmatpush.msra.mxu0 %v490
        %588 = vmatpush.msra.mxu0 %v488
        %589 = vmatpush.msra.mxu0 %v486
        %590 = vmatpush.msra.mxu0 %v484
        %591 = vmatpush.msra.mxu0 %v482
        %592 = vmatpush.msra.mxu0 %v480
        %593 = vmatmul.f32.gmra.mxu0 %v514
        %v594 = vpop.f32.mrf.mxu0
        %v595 = vadd.f32 %v575, %v594
        %596 = vdwg.mxu0
        %v597 = vsub.f32 1.0, %v276
        %v599 = vrot.slane %v597, 7
        %v600 = vrot.slane %v599, 2
        %v602 = vmul.f32 %v597, %v600
        %vm603 = vcmp.ge.s32.totalorder %v277, 0
        %vm604 = vcmp.le.s32.totalorder %v277, 15
        %vm605 = vmand %vm603, %vm604
        %v606 = vsel %vm603, 1, 0
        %v607 = vrot.slane %v606, 7
        %v608 = vrot.slane %v607, 2
        %vm609 = vcmp.ne.s32.totalorder %v608, 0
        %vm610 = vmand %vm605, %vm609
        %v611 = vsel %vm604, 1, 0
        %v612 = vrot.slane %v611, 7
        %v613 = vrot.slane %v612, 2
        %vm614 = vcmp.ne.s32.totalorder %v613, 0
        %vm615 = vmand %vm610, %vm614
        %v616 = vsel %vm615, %v602, 0.0
        %v618 = vperm.slane %v616, 0
        %v619 = vperm.slane %v616, 2
        %v622 = vperm.slane %v618, 0
        %v623 = vperm.slane %v619, 0
        %v624 = vmul.f32 %v555, %v622
        %v625 = vmul.f32 %v595, %v623
        %v626 = vrot.slane %v278, 7
        %v627 = vadd.s32 %v312, %v626
        %v628 = vperm.slane %v627, 1
        %v629 = vperm.slane %v627, 3
        %v630 = vperm.slane %v628, 1
        %v631 = vperm.slane %v629, 1
        %vm632 = vcmp.eq.s32.totalorder %v280, %v630
        %vm633 = vcmp.eq.s32.totalorder %v280, %v631
        %vm634 = vcmp.eq.s32.totalorder %v281, %v630
        %vm635 = vcmp.eq.s32.totalorder %v281, %v631
        %vm636 = vcmp.eq.s32.totalorder %v282, %v630
        %vm637 = vcmp.eq.s32.totalorder %v282, %v631
        %vm638 = vcmp.eq.s32.totalorder %v283, %v630
        %vm639 = vcmp.eq.s32.totalorder %v283, %v631
        %vm640 = vcmp.eq.s32.totalorder %v284, %v630
        %vm641 = vcmp.eq.s32.totalorder %v284, %v631
        %vm642 = vcmp.eq.s32.totalorder %v285, %v630
        %vm643 = vcmp.eq.s32.totalorder %v285, %v631
        %vm644 = vcmp.eq.s32.totalorder %v286, %v630
        %vm645 = vcmp.eq.s32.totalorder %v286, %v631
        %vm646 = vcmp.eq.s32.totalorder %v287, %v630
        %vm647 = vcmp.eq.s32.totalorder %v287, %v631
        %vm648 = vcmp.eq.s32.totalorder %v288, %v630
        %vm649 = vcmp.eq.s32.totalorder %v288, %v631
        %vm650 = vcmp.eq.s32.totalorder %v289, %v630
        %vm651 = vcmp.eq.s32.totalorder %v289, %v631
        %vm652 = vcmp.eq.s32.totalorder %v290, %v630
        %vm653 = vcmp.eq.s32.totalorder %v290, %v631
        %vm654 = vcmp.eq.s32.totalorder %v291, %v630
        %vm655 = vcmp.eq.s32.totalorder %v291, %v631
        %vm656 = vcmp.eq.s32.totalorder %v292, %v630
        %vm657 = vcmp.eq.s32.totalorder %v292, %v631
        %vm658 = vcmp.eq.s32.totalorder %v293, %v630
        %vm659 = vcmp.eq.s32.totalorder %v293, %v631
        %vm660 = vcmp.eq.s32.totalorder %v294, %v630
        %vm661 = vcmp.eq.s32.totalorder %v294, %v631
        %vm662 = vcmp.eq.s32.totalorder %v295, %v630
        %vm663 = vcmp.eq.s32.totalorder %v295, %v631
        %vm664 = vcmp.eq.s32.totalorder %v296, %v630
        %vm665 = vcmp.eq.s32.totalorder %v296, %v631
        %vm666 = vcmp.eq.s32.totalorder %v297, %v630
        %vm667 = vcmp.eq.s32.totalorder %v297, %v631
        %vm668 = vcmp.eq.s32.totalorder %v298, %v630
        %vm669 = vcmp.eq.s32.totalorder %v298, %v631
        %vm670 = vcmp.eq.s32.totalorder %v299, %v630
        %vm671 = vcmp.eq.s32.totalorder %v299, %v631
        %vm672 = vcmp.eq.s32.totalorder %v300, %v630
        %vm673 = vcmp.eq.s32.totalorder %v300, %v631
        %vm674 = vcmp.eq.s32.totalorder %v301, %v630
        %vm675 = vcmp.eq.s32.totalorder %v301, %v631
        %vm676 = vcmp.eq.s32.totalorder %v302, %v630
        %vm677 = vcmp.eq.s32.totalorder %v302, %v631
        %vm678 = vcmp.eq.s32.totalorder %v303, %v630
        %vm679 = vcmp.eq.s32.totalorder %v303, %v631
        %vm680 = vcmp.eq.s32.totalorder %v304, %v630
        %vm681 = vcmp.eq.s32.totalorder %v304, %v631
        %vm682 = vcmp.eq.s32.totalorder %v305, %v630
        %vm683 = vcmp.eq.s32.totalorder %v305, %v631
        %vm684 = vcmp.eq.s32.totalorder %v306, %v630
        %vm685 = vcmp.eq.s32.totalorder %v306, %v631
        %vm686 = vcmp.eq.s32.totalorder %v307, %v630
        %vm687 = vcmp.eq.s32.totalorder %v307, %v631
        %vm688 = vcmp.eq.s32.totalorder %v308, %v630
        %vm689 = vcmp.eq.s32.totalorder %v308, %v631
        %vm690 = vcmp.eq.s32.totalorder %v309, %v630
        %vm691 = vcmp.eq.s32.totalorder %v309, %v631
        %vm692 = vcmp.eq.s32.totalorder %v310, %v630
        %vm693 = vcmp.eq.s32.totalorder %v310, %v631
        %vm694 = vcmp.eq.s32.totalorder %v311, %v630
        %vm695 = vcmp.eq.s32.totalorder %v311, %v631
        %v696 = vsel %vm632, 1, 0
        %v697 = vsel %vm633, 1, 0
        %v698 = vsel %vm634, 1, 0
        %v699 = vsel %vm635, 1, 0
        %v700 = vsel %vm636, 1, 0
        %v701 = vsel %vm637, 1, 0
        %v702 = vsel %vm638, 1, 0
        %v703 = vsel %vm639, 1, 0
        %v704 = vsel %vm640, 1, 0
        %v705 = vsel %vm641, 1, 0
        %v706 = vsel %vm642, 1, 0
        %v707 = vsel %vm643, 1, 0
        %v708 = vsel %vm644, 1, 0
        %v709 = vsel %vm645, 1, 0
        %v710 = vsel %vm646, 1, 0
        %v711 = vsel %vm647, 1, 0
        %v712 = vsel %vm648, 1, 0
        %v713 = vsel %vm649, 1, 0
        %v714 = vsel %vm650, 1, 0
        %v715 = vsel %vm651, 1, 0
        %v716 = vsel %vm652, 1, 0
        %v717 = vsel %vm653, 1, 0
        %v718 = vsel %vm654, 1, 0
        %v719 = vsel %vm655, 1, 0
        %v720 = vsel %vm656, 1, 0
        %v721 = vsel %vm657, 1, 0
        %v722 = vsel %vm658, 1, 0
        %v723 = vsel %vm659, 1, 0
        %v724 = vsel %vm660, 1, 0
        %v725 = vsel %vm661, 1, 0
        %v726 = vsel %vm662, 1, 0
        %v727 = vsel %vm663, 1, 0
        %v728 = vsel %vm664, 1, 0
        %v729 = vsel %vm665, 1, 0
        %v730 = vsel %vm666, 1, 0
        %v731 = vsel %vm667, 1, 0
        %v732 = vsel %vm668, 1, 0
        %v733 = vsel %vm669, 1, 0
        %v734 = vsel %vm670, 1, 0
        %v735 = vsel %vm671, 1, 0
        %v736 = vsel %vm672, 1, 0
        %v737 = vsel %vm673, 1, 0
        %v738 = vsel %vm674, 1, 0
        %v739 = vsel %vm675, 1, 0
        %v740 = vsel %vm676, 1, 0
        %v741 = vsel %vm677, 1, 0
        %v742 = vsel %vm678, 1, 0
        %v743 = vsel %vm679, 1, 0
        %v744 = vsel %vm680, 1, 0
        %v745 = vsel %vm681, 1, 0
        %v746 = vsel %vm682, 1, 0
        %v747 = vsel %vm683, 1, 0
        %v748 = vsel %vm684, 1, 0
        %v749 = vsel %vm685, 1, 0
        %v750 = vsel %vm686, 1, 0
        %v751 = vsel %vm687, 1, 0
        %v752 = vsel %vm688, 1, 0
        %v753 = vsel %vm689, 1, 0
        %v754 = vsel %vm690, 1, 0
        %v755 = vsel %vm691, 1, 0
        %v756 = vsel %vm692, 1, 0
        %v757 = vsel %vm693, 1, 0
        %v758 = vsel %vm694, 1, 0
        %v759 = vsel %vm695, 1, 0
        %v760 = vcvt.s32.f32 %v696
        %v761 = vcvt.s32.f32 %v697
        %v762 = vcvt.s32.f32 %v698
        %v763 = vcvt.s32.f32 %v699
        %v764 = vcvt.s32.f32 %v700
        %v765 = vcvt.s32.f32 %v701
        %v766 = vcvt.s32.f32 %v702
        %v767 = vcvt.s32.f32 %v703
        %v768 = vcvt.s32.f32 %v704
        %v769 = vcvt.s32.f32 %v705
        %v770 = vcvt.s32.f32 %v706
        %v771 = vcvt.s32.f32 %v707
        %v772 = vcvt.s32.f32 %v708
        %v773 = vcvt.s32.f32 %v709
        %v774 = vcvt.s32.f32 %v710
        %v775 = vcvt.s32.f32 %v711
        %v776 = vcvt.s32.f32 %v712
        %v777 = vcvt.s32.f32 %v713
        %v778 = vcvt.s32.f32 %v714
        %v779 = vcvt.s32.f32 %v715
        %v780 = vcvt.s32.f32 %v716
        %v781 = vcvt.s32.f32 %v717
        %v782 = vcvt.s32.f32 %v718
        %v783 = vcvt.s32.f32 %v719
        %v784 = vcvt.s32.f32 %v720
        %v785 = vcvt.s32.f32 %v721
        %v786 = vcvt.s32.f32 %v722
        %v787 = vcvt.s32.f32 %v723
        %v788 = vcvt.s32.f32 %v724
        %v789 = vcvt.s32.f32 %v725
        %v790 = vcvt.s32.f32 %v726
        %v791 = vcvt.s32.f32 %v727
        %v792 = vcvt.s32.f32 %v728
        %v793 = vcvt.s32.f32 %v729
        %v794 = vcvt.s32.f32 %v730
        %v795 = vcvt.s32.f32 %v731
        %v796 = vcvt.s32.f32 %v732
        %v797 = vcvt.s32.f32 %v733
        %v798 = vcvt.s32.f32 %v734
        %v799 = vcvt.s32.f32 %v735
        %v800 = vcvt.s32.f32 %v736
        %v801 = vcvt.s32.f32 %v737
        %v802 = vcvt.s32.f32 %v738
        %v803 = vcvt.s32.f32 %v739
        %v804 = vcvt.s32.f32 %v740
        %v805 = vcvt.s32.f32 %v741
        %v806 = vcvt.s32.f32 %v742
        %v807 = vcvt.s32.f32 %v743
        %v808 = vcvt.s32.f32 %v744
        %v809 = vcvt.s32.f32 %v745
        %v810 = vcvt.s32.f32 %v746
        %v811 = vcvt.s32.f32 %v747
        %v812 = vcvt.s32.f32 %v748
        %v813 = vcvt.s32.f32 %v749
        %v814 = vcvt.s32.f32 %v750
        %v815 = vcvt.s32.f32 %v751
        %v816 = vcvt.s32.f32 %v752
        %v817 = vcvt.s32.f32 %v753
        %v818 = vcvt.s32.f32 %v754
        %v819 = vcvt.s32.f32 %v755
        %v820 = vcvt.s32.f32 %v756
        %v821 = vcvt.s32.f32 %v757
        %v822 = vcvt.s32.f32 %v758
        %v823 = vcvt.s32.f32 %v759
        %824 = vst [vmem:[#allocation1] ss:$2 sm:$0xff] %v270
        %v825 = vld.sshfl [vmem:[#allocation1] sm:$0xff pattern:$0x75316420]
        %v826 = vld.sshfl [vmem:[#allocation1 + $0x8] sm:$0xff pattern:$0x75316420]
        %829 = vmatpush.msra.mxu0 %v790
        %830 = vmatpush.msra.mxu0 %v788
        %831 = vmatpush.msra.mxu0 %v786
        %832 = vmatpush.msra.mxu0 %v784
        %833 = vmatpush.msra.mxu0 %v782
        %834 = vmatpush.msra.mxu0 %v780
        %835 = vmatpush.msra.mxu0 %v778
        %836 = vmatpush.msra.mxu0 %v776
        %837 = vmatpush.msra.mxu0 %v774
        %838 = vmatpush.msra.mxu0 %v772
        %839 = vmatpush.msra.mxu0 %v770
        %840 = vmatpush.msra.mxu0 %v768
        %841 = vmatpush.msra.mxu0 %v766
        %842 = vmatpush.msra.mxu0 %v764
        %843 = vmatpush.msra.mxu0 %v762
        %844 = vmatpush.msra.mxu0 %v760
        %845 = vmatmul.f32.gmra.mxu0 %v825
        %v846 = vpop.f32.mrf.mxu0
        %v847 = vadd.f32 0.0, %v846
        %848 = vdwg.mxu0
        %849 = vmatpush.msra.mxu0 %v822
        %850 = vmatpush.msra.mxu0 %v820
        %851 = vmatpush.msra.mxu0 %v818
        %852 = vmatpush.msra.mxu0 %v816
        %853 = vmatpush.msra.mxu0 %v814
        %854 = vmatpush.msra.mxu0 %v812
        %855 = vmatpush.msra.mxu0 %v810
        %856 = vmatpush.msra.mxu0 %v808
        %857 = vmatpush.msra.mxu0 %v806
        %858 = vmatpush.msra.mxu0 %v804
        %859 = vmatpush.msra.mxu0 %v802
        %860 = vmatpush.msra.mxu0 %v800
        %861 = vmatpush.msra.mxu0 %v798
        %862 = vmatpush.msra.mxu0 %v796
        %863 = vmatpush.msra.mxu0 %v794
        %864 = vmatpush.msra.mxu0 %v792
        %865 = vmatmul.f32.gmra.mxu0 %v826
        %v866 = vpop.f32.mrf.mxu0
        %v867 = vadd.f32 %v847, %v866
        %868 = vdwg.mxu0
        %869 = vmatpush.msra.mxu0 %v791
        %870 = vmatpush.msra.mxu0 %v789
        %871 = vmatpush.msra.mxu0 %v787
        %872 = vmatpush.msra.mxu0 %v785
        %873 = vmatpush.msra.mxu0 %v783
        %874 = vmatpush.msra.mxu0 %v781
        %875 = vmatpush.msra.mxu0 %v779
        %876 = vmatpush.msra.mxu0 %v777
        %877 = vmatpush.msra.mxu0 %v775
        %878 = vmatpush.msra.mxu0 %v773
        %879 = vmatpush.msra.mxu0 %v771
        %880 = vmatpush.msra.mxu0 %v769
        %881 = vmatpush.msra.mxu0 %v767
        %882 = vmatpush.msra.mxu0 %v765
        %883 = vmatpush.msra.mxu0 %v763
        %884 = vmatpush.msra.mxu0 %v761
        %885 = vmatmul.f32.gmra.mxu0 %v825
        %v886 = vpop.f32.mrf.mxu0
        %v887 = vadd.f32 0.0, %v886
        %888 = vdwg.mxu0
        %889 = vmatpush.msra.mxu0 %v823
        %890 = vmatpush.msra.mxu0 %v821
        %891 = vmatpush.msra.mxu0 %v819
        %892 = vmatpush.msra.mxu0 %v817
        %893 = vmatpush.msra.mxu0 %v815
        %894 = vmatpush.msra.mxu0 %v813
        %895 = vmatpush.msra.mxu0 %v811
        %896 = vmatpush.msra.mxu0 %v809
        %897 = vmatpush.msra.mxu0 %v807
        %898 = vmatpush.msra.mxu0 %v805
        %899 = vmatpush.msra.mxu0 %v803
        %900 = vmatpush.msra.mxu0 %v801
        %901 = vmatpush.msra.mxu0 %v799
        %902 = vmatpush.msra.mxu0 %v797
        %903 = vmatpush.msra.mxu0 %v795
        %904 = vmatpush.msra.mxu0 %v793
        %905 = vmatmul.f32.gmra.mxu0 %v826
        %v906 = vpop.f32.mrf.mxu0
        %v907 = vadd.f32 %v887, %v906
        %908 = vdwg.mxu0
        %v909 = vmul.f32 %v276, %v600
        %vm910 = vcmp.ge.s32.totalorder %v278, 0
        %vm911 = vcmp.le.s32.totalorder %v278, 15
        %vm912 = vmand %vm910, %vm911
        %vm913 = vmand %vm912, %vm609
        %vm914 = vmand %vm913, %vm614
        %v915 = vsel %vm914, %v909, 0.0
        %v917 = vperm.slane %v915, 0
        %v918 = vperm.slane %v915, 2
        %v921 = vperm.slane %v917, 0
        %v922 = vperm.slane %v918, 0
        %v923 = vmul.f32 %v867, %v921
        %v924 = vmul.f32 %v907, %v922
        %v925 = vadd.f32 %v624, %v923
        %v926 = vadd.f32 %v625, %v924
        %v927 = vmul.u32 %v278, 16
        %v928 = vadd.s32 %v927, %v313
        %v929 = vperm.slane %v928, 1
        %v930 = vperm.slane %v928, 3
        %v931 = vperm.slane %v929, 1
        %v932 = vperm.slane %v930, 1
        %vm933 = vcmp.eq.s32.totalorder %v280, %v931
        %vm934 = vcmp.eq.s32.totalorder %v280, %v932
        %vm935 = vcmp.eq.s32.totalorder %v281, %v931
        %vm936 = vcmp.eq.s32.totalorder %v281, %v932
        %vm937 = vcmp.eq.s32.totalorder %v282, %v931
        %vm938 = vcmp.eq.s32.totalorder %v282, %v932
        %vm939 = vcmp.eq.s32.totalorder %v283, %v931
        %vm940 = vcmp.eq.s32.totalorder %v283, %v932
        %vm941 = vcmp.eq.s32.totalorder %v284, %v931
        %vm942 = vcmp.eq.s32.totalorder %v284, %v932
        %vm943 = vcmp.eq.s32.totalorder %v285, %v931
        %vm944 = vcmp.eq.s32.totalorder %v285, %v932
        %vm945 = vcmp.eq.s32.totalorder %v286, %v931
        %vm946 = vcmp.eq.s32.totalorder %v286, %v932
        %vm947 = vcmp.eq.s32.totalorder %v287, %v931
        %vm948 = vcmp.eq.s32.totalorder %v287, %v932
        %vm949 = vcmp.eq.s32.totalorder %v288, %v931
        %vm950 = vcmp.eq.s32.totalorder %v288, %v932
        %vm951 = vcmp.eq.s32.totalorder %v289, %v931
        %vm952 = vcmp.eq.s32.totalorder %v289, %v932
        %vm953 = vcmp.eq.s32.totalorder %v290, %v931
        %vm954 = vcmp.eq.s32.totalorder %v290, %v932
        %vm955 = vcmp.eq.s32.totalorder %v291, %v931
        %vm956 = vcmp.eq.s32.totalorder %v291, %v932
        %vm957 = vcmp.eq.s32.totalorder %v292, %v931
        %vm958 = vcmp.eq.s32.totalorder %v292, %v932
        %vm959 = vcmp.eq.s32.totalorder %v293, %v931
        %vm960 = vcmp.eq.s32.totalorder %v293, %v932
        %vm961 = vcmp.eq.s32.totalorder %v294, %v931
        %vm962 = vcmp.eq.s32.totalorder %v294, %v932
        %vm963 = vcmp.eq.s32.totalorder %v295, %v931
        %vm964 = vcmp.eq.s32.totalorder %v295, %v932
        %vm965 = vcmp.eq.s32.totalorder %v296, %v931
        %vm966 = vcmp.eq.s32.totalorder %v296, %v932
        %vm967 = vcmp.eq.s32.totalorder %v297, %v931
        %vm968 = vcmp.eq.s32.totalorder %v297, %v932
        %vm969 = vcmp.eq.s32.totalorder %v298, %v931
        %vm970 = vcmp.eq.s32.totalorder %v298, %v932
        %vm971 = vcmp.eq.s32.totalorder %v299, %v931
        %vm972 = vcmp.eq.s32.totalorder %v299, %v932
        %vm973 = vcmp.eq.s32.totalorder %v300, %v931
        %vm974 = vcmp.eq.s32.totalorder %v300, %v932
        %vm975 = vcmp.eq.s32.totalorder %v301, %v931
        %vm976 = vcmp.eq.s32.totalorder %v301, %v932
        %vm977 = vcmp.eq.s32.totalorder %v302, %v931
        %vm978 = vcmp.eq.s32.totalorder %v302, %v932
        %vm979 = vcmp.eq.s32.totalorder %v303, %v931
        %vm980 = vcmp.eq.s32.totalorder %v303, %v932
        %vm981 = vcmp.eq.s32.totalorder %v304, %v931
        %vm982 = vcmp.eq.s32.totalorder %v304, %v932
        %vm983 = vcmp.eq.s32.totalorder %v305, %v931
        %vm984 = vcmp.eq.s32.totalorder %v305, %v932
        %vm985 = vcmp.eq.s32.totalorder %v306, %v931
        %vm986 = vcmp.eq.s32.totalorder %v306, %v932
        %vm987 = vcmp.eq.s32.totalorder %v307, %v931
        %vm988 = vcmp.eq.s32.totalorder %v307, %v932
        %vm989 = vcmp.eq.s32.totalorder %v308, %v931
        %vm990 = vcmp.eq.s32.totalorder %v308, %v932
        %vm991 = vcmp.eq.s32.totalorder %v309, %v931
        %vm992 = vcmp.eq.s32.totalorder %v309, %v932
        %vm993 = vcmp.eq.s32.totalorder %v310, %v931
        %vm994 = vcmp.eq.s32.totalorder %v310, %v932
        %vm995 = vcmp.eq.s32.totalorder %v311, %v931
        %vm996 = vcmp.eq.s32.totalorder %v311, %v932
        %v997 = vsel %vm933, 1, 0
        %v998 = vsel %vm934, 1, 0
        %v999 = vsel %vm935, 1, 0
        %v1000 = vsel %vm936, 1, 0
        %v1001 = vsel %vm937, 1, 0
        %v1002 = vsel %vm938, 1, 0
        %v1003 = vsel %vm939, 1, 0
        %v1004 = vsel %vm940, 1, 0
        %v1005 = vsel %vm941, 1, 0
        %v1006 = vsel %vm942, 1, 0
        %v1007 = vsel %vm943, 1, 0
        %v1008 = vsel %vm944, 1, 0
        %v1009 = vsel %vm945, 1, 0
        %v1010 = vsel %vm946, 1, 0
        %v1011 = vsel %vm947, 1, 0
        %v1012 = vsel %vm948, 1, 0
        %v1013 = vsel %vm949, 1, 0
        %v1014 = vsel %vm950, 1, 0
        %v1015 = vsel %vm951, 1, 0
        %v1016 = vsel %vm952, 1, 0
        %v1017 = vsel %vm953, 1, 0
        %v1018 = vsel %vm954, 1, 0
        %v1019 = vsel %vm955, 1, 0
        %v1020 = vsel %vm956, 1, 0
        %v1021 = vsel %vm957, 1, 0
        %v1022 = vsel %vm958, 1, 0
        %v1023 = vsel %vm959, 1, 0
        %v1024 = vsel %vm960, 1, 0
        %v1025 = vsel %vm961, 1, 0
        %v1026 = vsel %vm962, 1, 0
        %v1027 = vsel %vm963, 1, 0
        %v1028 = vsel %vm964, 1, 0
        %v1029 = vsel %vm965, 1, 0
        %v1030 = vsel %vm966, 1, 0
        %v1031 = vsel %vm967, 1, 0
        %v1032 = vsel %vm968, 1, 0
        %v1033 = vsel %vm969, 1, 0
        %v1034 = vsel %vm970, 1, 0
        %v1035 = vsel %vm971, 1, 0
        %v1036 = vsel %vm972, 1, 0
        %v1037 = vsel %vm973, 1, 0
        %v1038 = vsel %vm974, 1, 0
        %v1039 = vsel %vm975, 1, 0
        %v1040 = vsel %vm976, 1, 0
        %v1041 = vsel %vm977, 1, 0
        %v1042 = vsel %vm978, 1, 0
        %v1043 = vsel %vm979, 1, 0
        %v1044 = vsel %vm980, 1, 0
        %v1045 = vsel %vm981, 1, 0
        %v1046 = vsel %vm982, 1, 0
        %v1047 = vsel %vm983, 1, 0
        %v1048 = vsel %vm984, 1, 0
        %v1049 = vsel %vm985, 1, 0
        %v1050 = vsel %vm986, 1, 0
        %v1051 = vsel %vm987, 1, 0
        %v1052 = vsel %vm988, 1, 0
        %v1053 = vsel %vm989, 1, 0
        %v1054 = vsel %vm990, 1, 0
        %v1055 = vsel %vm991, 1, 0
        %v1056 = vsel %vm992, 1, 0
        %v1057 = vsel %vm993, 1, 0
        %v1058 = vsel %vm994, 1, 0
        %v1059 = vsel %vm995, 1, 0
        %v1060 = vsel %vm996, 1, 0
        %v1061 = vcvt.s32.f32 %v997
        %v1062 = vcvt.s32.f32 %v998
        %v1063 = vcvt.s32.f32 %v999
        %v1064 = vcvt.s32.f32 %v1000
        %v1065 = vcvt.s32.f32 %v1001
        %v1066 = vcvt.s32.f32 %v1002
        %v1067 = vcvt.s32.f32 %v1003
        %v1068 = vcvt.s32.f32 %v1004
        %v1069 = vcvt.s32.f32 %v1005
        %v1070 = vcvt.s32.f32 %v1006
        %v1071 = vcvt.s32.f32 %v1007
        %v1072 = vcvt.s32.f32 %v1008
        %v1073 = vcvt.s32.f32 %v1009
        %v1074 = vcvt.s32.f32 %v1010
        %v1075 = vcvt.s32.f32 %v1011
        %v1076 = vcvt.s32.f32 %v1012
        %v1077 = vcvt.s32.f32 %v1013
        %v1078 = vcvt.s32.f32 %v1014
        %v1079 = vcvt.s32.f32 %v1015
        %v1080 = vcvt.s32.f32 %v1016
        %v1081 = vcvt.s32.f32 %v1017
        %v1082 = vcvt.s32.f32 %v1018
        %v1083 = vcvt.s32.f32 %v1019
        %v1084 = vcvt.s32.f32 %v1020
        %v1085 = vcvt.s32.f32 %v1021
        %v1086 = vcvt.s32.f32 %v1022
        %v1087 = vcvt.s32.f32 %v1023
        %v1088 = vcvt.s32.f32 %v1024
        %v1089 = vcvt.s32.f32 %v1025
        %v1090 = vcvt.s32.f32 %v1026
        %v1091 = vcvt.s32.f32 %v1027
        %v1092 = vcvt.s32.f32 %v1028
        %v1093 = vcvt.s32.f32 %v1029
        %v1094 = vcvt.s32.f32 %v1030
        %v1095 = vcvt.s32.f32 %v1031
        %v1096 = vcvt.s32.f32 %v1032
        %v1097 = vcvt.s32.f32 %v1033
        %v1098 = vcvt.s32.f32 %v1034
        %v1099 = vcvt.s32.f32 %v1035
        %v1100 = vcvt.s32.f32 %v1036
        %v1101 = vcvt.s32.f32 %v1037
        %v1102 = vcvt.s32.f32 %v1038
        %v1103 = vcvt.s32.f32 %v1039
        %v1104 = vcvt.s32.f32 %v1040
        %v1105 = vcvt.s32.f32 %v1041
        %v1106 = vcvt.s32.f32 %v1042
        %v1107 = vcvt.s32.f32 %v1043
        %v1108 = vcvt.s32.f32 %v1044
        %v1109 = vcvt.s32.f32 %v1045
        %v1110 = vcvt.s32.f32 %v1046
        %v1111 = vcvt.s32.f32 %v1047
        %v1112 = vcvt.s32.f32 %v1048
        %v1113 = vcvt.s32.f32 %v1049
        %v1114 = vcvt.s32.f32 %v1050
        %v1115 = vcvt.s32.f32 %v1051
        %v1116 = vcvt.s32.f32 %v1052
        %v1117 = vcvt.s32.f32 %v1053
        %v1118 = vcvt.s32.f32 %v1054
        %v1119 = vcvt.s32.f32 %v1055
        %v1120 = vcvt.s32.f32 %v1056
        %v1121 = vcvt.s32.f32 %v1057
        %v1122 = vcvt.s32.f32 %v1058
        %v1123 = vcvt.s32.f32 %v1059
        %v1124 = vcvt.s32.f32 %v1060
        %1125 = vst [vmem:[#allocation1] ss:$2 sm:$0xff] %v270
        %v1126 = vld.sshfl [vmem:[#allocation1] sm:$0xff pattern:$0x75316420]
        %v1127 = vld.sshfl [vmem:[#allocation1 + $0x8] sm:$0xff pattern:$0x75316420]
        %1130 = vmatpush.msra.mxu0 %v1091
        %1131 = vmatpush.msra.mxu0 %v1089
        %1132 = vmatpush.msra.mxu0 %v1087
        %1133 = vmatpush.msra.mxu0 %v1085
        %1134 = vmatpush.msra.mxu0 %v1083
        %1135 = vmatpush.msra.mxu0 %v1081
        %1136 = vmatpush.msra.mxu0 %v1079
        %1137 = vmatpush.msra.mxu0 %v1077
        %1138 = vmatpush.msra.mxu0 %v1075
        %1139 = vmatpush.msra.mxu0 %v1073
        %1140 = vmatpush.msra.mxu0 %v1071
        %1141 = vmatpush.msra.mxu0 %v1069
        %1142 = vmatpush.msra.mxu0 %v1067
        %1143 = vmatpush.msra.mxu0 %v1065
        %1144 = vmatpush.msra.mxu0 %v1063
        %1145 = vmatpush.msra.mxu0 %v1061
        %1146 = vmatmul.f32.gmra.mxu0 %v1126
        %v1147 = vpop.f32.mrf.mxu0
        %v1148 = vadd.f32 0.0, %v1147
        %1149 = vdwg.mxu0
        %1150 = vmatpush.msra.mxu0 %v1123
        %1151 = vmatpush.msra.mxu0 %v1121
        %1152 = vmatpush.msra.mxu0 %v1119
        %1153 = vmatpush.msra.mxu0 %v1117
        %1154 = vmatpush.msra.mxu0 %v1115
        %1155 = vmatpush.msra.mxu0 %v1113
        %1156 = vmatpush.msra.mxu0 %v1111
        %1157 = vmatpush.msra.mxu0 %v1109
        %1158 = vmatpush.msra.mxu0 %v1107
        %1159 = vmatpush.msra.mxu0 %v1105
        %1160 = vmatpush.msra.mxu0 %v1103
        %1161 = vmatpush.msra.mxu0 %v1101
        %1162 = vmatpush.msra.mxu0 %v1099
        %1163 = vmatpush.msra.mxu0 %v1097
        %1164 = vmatpush.msra.mxu0 %v1095
        %1165 = vmatpush.msra.mxu0 %v1093
        %1166 = vmatmul.f32.gmra.mxu0 %v1127
        %v1167 = vpop.f32.mrf.mxu0
        %v1168 = vadd.f32 %v1148, %v1167
        %1169 = vdwg.mxu0
        %1170 = vmatpush.msra.mxu0 %v1092
        %1171 = vmatpush.msra.mxu0 %v1090
        %1172 = vmatpush.msra.mxu0 %v1088
        %1173 = vmatpush.msra.mxu0 %v1086
        %1174 = vmatpush.msra.mxu0 %v1084
        %1175 = vmatpush.msra.mxu0 %v1082
        %1176 = vmatpush.msra.mxu0 %v1080
        %1177 = vmatpush.msra.mxu0 %v1078
        %1178 = vmatpush.msra.mxu0 %v1076
        %1179 = vmatpush.msra.mxu0 %v1074
        %1180 = vmatpush.msra.mxu0 %v1072
        %1181 = vmatpush.msra.mxu0 %v1070
        %1182 = vmatpush.msra.mxu0 %v1068
        %1183 = vmatpush.msra.mxu0 %v1066
        %1184 = vmatpush.msra.mxu0 %v1064
        %1185 = vmatpush.msra.mxu0 %v1062
        %1186 = vmatmul.f32.gmra.mxu0 %v1126
        %v1187 = vpop.f32.mrf.mxu0
        %v1188 = vadd.f32 0.0, %v1187
        %1189 = vdwg.mxu0
        %1190 = vmatpush.msra.mxu0 %v1124
        %1191 = vmatpush.msra.mxu0 %v1122
        %1192 = vmatpush.msra.mxu0 %v1120
        %1193 = vmatpush.msra.mxu0 %v1118
        %1194 = vmatpush.msra.mxu0 %v1116
        %1195 = vmatpush.msra.mxu0 %v1114
        %1196 = vmatpush.msra.mxu0 %v1112
        %1197 = vmatpush.msra.mxu0 %v1110
        %1198 = vmatpush.msra.mxu0 %v1108
        %1199 = vmatpush.msra.mxu0 %v1106
        %1200 = vmatpush.msra.mxu0 %v1104
        %1201 = vmatpush.msra.mxu0 %v1102
        %1202 = vmatpush.msra.mxu0 %v1100
        %1203 = vmatpush.msra.mxu0 %v1098
        %1204 = vmatpush.msra.mxu0 %v1096
        %1205 = vmatpush.msra.mxu0 %v1094
        %1206 = vmatmul.f32.gmra.mxu0 %v1127
        %v1207 = vpop.f32.mrf.mxu0
        %v1208 = vadd.f32 %v1188, %v1207
        %1209 = vdwg.mxu0
        %v1211 = vrot.slane %v276, 7
        %v1212 = vrot.slane %v1211, 2
        %v1214 = vmul.f32 %v597, %v1212
        %v1215 = vsel %vm910, 1, 0
        %v1216 = vrot.slane %v1215, 7
        %v1217 = vrot.slane %v1216, 2
        %vm1218 = vcmp.ne.s32.totalorder %v1217, 0
        %vm1219 = vmand %vm605, %vm1218
        %v1220 = vsel %vm911, 1, 0
        %v1221 = vrot.slane %v1220, 7
        %v1222 = vrot.slane %v1221, 2
        %vm1223 = vcmp.ne.s32.totalorder %v1222, 0
        %vm1224 = vmand %vm1219, %vm1223
        %v1225 = vsel %vm1224, %v1214, 0.0
        %v1227 = vperm.slane %v1225, 0
        %v1228 = vperm.slane %v1225, 2
        %v1231 = vperm.slane %v1227, 0
        %v1232 = vperm.slane %v1228, 0
        %v1233 = vmul.f32 %v1168, %v1231
        %v1234 = vmul.f32 %v1208, %v1232
        %v1235 = vadd.f32 %v925, %v1233
        %v1236 = vadd.f32 %v926, %v1234
        %v1237 = vadd.s32 %v927, %v626
        %v1238 = vperm.slane %v1237, 1
        %v1239 = vperm.slane %v1237, 3
        %v1240 = vperm.slane %v1238, 1
        %v1241 = vperm.slane %v1239, 1
        %vm1242 = vcmp.eq.s32.totalorder %v280, %v1240
        %vm1243 = vcmp.eq.s32.totalorder %v280, %v1241
        %vm1244 = vcmp.eq.s32.totalorder %v281, %v1240
        %vm1245 = vcmp.eq.s32.totalorder %v281, %v1241
        %vm1246 = vcmp.eq.s32.totalorder %v282, %v1240
        %vm1247 = vcmp.eq.s32.totalorder %v282, %v1241
        %vm1248 = vcmp.eq.s32.totalorder %v283, %v1240
        %vm1249 = vcmp.eq.s32.totalorder %v283, %v1241
        %vm1250 = vcmp.eq.s32.totalorder %v284, %v1240
        %vm1251 = vcmp.eq.s32.totalorder %v284, %v1241
        %vm1252 = vcmp.eq.s32.totalorder %v285, %v1240
        %vm1253 = vcmp.eq.s32.totalorder %v285, %v1241
        %vm1254 = vcmp.eq.s32.totalorder %v286, %v1240
        %vm1255 = vcmp.eq.s32.totalorder %v286, %v1241
        %vm1256 = vcmp.eq.s32.totalorder %v287, %v1240
        %vm1257 = vcmp.eq.s32.totalorder %v287, %v1241
        %vm1258 = vcmp.eq.s32.totalorder %v288, %v1240
        %vm1259 = vcmp.eq.s32.totalorder %v288, %v1241
        %vm1260 = vcmp.eq.s32.totalorder %v289, %v1240
        %vm1261 = vcmp.eq.s32.totalorder %v289, %v1241
        %vm1262 = vcmp.eq.s32.totalorder %v290, %v1240
        %vm1263 = vcmp.eq.s32.totalorder %v290, %v1241
        %vm1264 = vcmp.eq.s32.totalorder %v291, %v1240
        %vm1265 = vcmp.eq.s32.totalorder %v291, %v1241
        %vm1266 = vcmp.eq.s32.totalorder %v292, %v1240
        %vm1267 = vcmp.eq.s32.totalorder %v292, %v1241
        %vm1268 = vcmp.eq.s32.totalorder %v293, %v1240
        %vm1269 = vcmp.eq.s32.totalorder %v293, %v1241
        %vm1270 = vcmp.eq.s32.totalorder %v294, %v1240
        %vm1271 = vcmp.eq.s32.totalorder %v294, %v1241
        %vm1272 = vcmp.eq.s32.totalorder %v295, %v1240
        %vm1273 = vcmp.eq.s32.totalorder %v295, %v1241
        %vm1274 = vcmp.eq.s32.totalorder %v296, %v1240
        %vm1275 = vcmp.eq.s32.totalorder %v296, %v1241
        %vm1276 = vcmp.eq.s32.totalorder %v297, %v1240
        %vm1277 = vcmp.eq.s32.totalorder %v297, %v1241
        %vm1278 = vcmp.eq.s32.totalorder %v298, %v1240
        %vm1279 = vcmp.eq.s32.totalorder %v298, %v1241
        %vm1280 = vcmp.eq.s32.totalorder %v299, %v1240
        %vm1281 = vcmp.eq.s32.totalorder %v299, %v1241
        %vm1282 = vcmp.eq.s32.totalorder %v300, %v1240
        %vm1283 = vcmp.eq.s32.totalorder %v300, %v1241
        %vm1284 = vcmp.eq.s32.totalorder %v301, %v1240
        %vm1285 = vcmp.eq.s32.totalorder %v301, %v1241
        %vm1286 = vcmp.eq.s32.totalorder %v302, %v1240
        %vm1287 = vcmp.eq.s32.totalorder %v302, %v1241
        %vm1288 = vcmp.eq.s32.totalorder %v303, %v1240
        %vm1289 = vcmp.eq.s32.totalorder %v303, %v1241
        %vm1290 = vcmp.eq.s32.totalorder %v304, %v1240
        %vm1291 = vcmp.eq.s32.totalorder %v304, %v1241
        %vm1292 = vcmp.eq.s32.totalorder %v305, %v1240
        %vm1293 = vcmp.eq.s32.totalorder %v305, %v1241
        %vm1294 = vcmp.eq.s32.totalorder %v306, %v1240
        %vm1295 = vcmp.eq.s32.totalorder %v306, %v1241
        %vm1296 = vcmp.eq.s32.totalorder %v307, %v1240
        %vm1297 = vcmp.eq.s32.totalorder %v307, %v1241
        %vm1298 = vcmp.eq.s32.totalorder %v308, %v1240
        %vm1299 = vcmp.eq.s32.totalorder %v308, %v1241
        %vm1300 = vcmp.eq.s32.totalorder %v309, %v1240
        %vm1301 = vcmp.eq.s32.totalorder %v309, %v1241
        %vm1302 = vcmp.eq.s32.totalorder %v310, %v1240
        %vm1303 = vcmp.eq.s32.totalorder %v310, %v1241
        %vm1304 = vcmp.eq.s32.totalorder %v311, %v1240
        %vm1305 = vcmp.eq.s32.totalorder %v311, %v1241
        %v1306 = vsel %vm1242, 1, 0
        %v1307 = vsel %vm1243, 1, 0
        %v1308 = vsel %vm1244, 1, 0
        %v1309 = vsel %vm1245, 1, 0
        %v1310 = vsel %vm1246, 1, 0
        %v1311 = vsel %vm1247, 1, 0
        %v1312 = vsel %vm1248, 1, 0
        %v1313 = vsel %vm1249, 1, 0
        %v1314 = vsel %vm1250, 1, 0
        %v1315 = vsel %vm1251, 1, 0
        %v1316 = vsel %vm1252, 1, 0
        %v1317 = vsel %vm1253, 1, 0
        %v1318 = vsel %vm1254, 1, 0
        %v1319 = vsel %vm1255, 1, 0
        %v1320 = vsel %vm1256, 1, 0
        %v1321 = vsel %vm1257, 1, 0
        %v1322 = vsel %vm1258, 1, 0
        %v1323 = vsel %vm1259, 1, 0
        %v1324 = vsel %vm1260, 1, 0
        %v1325 = vsel %vm1261, 1, 0
        %v1326 = vsel %vm1262, 1, 0
        %v1327 = vsel %vm1263, 1, 0
        %v1328 = vsel %vm1264, 1, 0
        %v1329 = vsel %vm1265, 1, 0
        %v1330 = vsel %vm1266, 1, 0
        %v1331 = vsel %vm1267, 1, 0
        %v1332 = vsel %vm1268, 1, 0
        %v1333 = vsel %vm1269, 1, 0
        %v1334 = vsel %vm1270, 1, 0
        %v1335 = vsel %vm1271, 1, 0
        %v1336 = vsel %vm1272, 1, 0
        %v1337 = vsel %vm1273, 1, 0
        %v1338 = vsel %vm1274, 1, 0
        %v1339 = vsel %vm1275, 1, 0
        %v1340 = vsel %vm1276, 1, 0
        %v1341 = vsel %vm1277, 1, 0
        %v1342 = vsel %vm1278, 1, 0
        %v1343 = vsel %vm1279, 1, 0
        %v1344 = vsel %vm1280, 1, 0
        %v1345 = vsel %vm1281, 1, 0
        %v1346 = vsel %vm1282, 1, 0
        %v1347 = vsel %vm1283, 1, 0
        %v1348 = vsel %vm1284, 1, 0
        %v1349 = vsel %vm1285, 1, 0
        %v1350 = vsel %vm1286, 1, 0
        %v1351 = vsel %vm1287, 1, 0
        %v1352 = vsel %vm1288, 1, 0
        %v1353 = vsel %vm1289, 1, 0
        %v1354 = vsel %vm1290, 1, 0
        %v1355 = vsel %vm1291, 1, 0
        %v1356 = vsel %vm1292, 1, 0
        %v1357 = vsel %vm1293, 1, 0
        %v1358 = vsel %vm1294, 1, 0
        %v1359 = vsel %vm1295, 1, 0
        %v1360 = vsel %vm1296, 1, 0
        %v1361 = vsel %vm1297, 1, 0
        %v1362 = vsel %vm1298, 1, 0
        %v1363 = vsel %vm1299, 1, 0
        %v1364 = vsel %vm1300, 1, 0
        %v1365 = vsel %vm1301, 1, 0
        %v1366 = vsel %vm1302, 1, 0
        %v1367 = vsel %vm1303, 1, 0
        %v1368 = vsel %vm1304, 1, 0
        %v1369 = vsel %vm1305, 1, 0
        %v1370 = vcvt.s32.f32 %v1306
        %v1371 = vcvt.s32.f32 %v1307
        %v1372 = vcvt.s32.f32 %v1308
        %v1373 = vcvt.s32.f32 %v1309
        %v1374 = vcvt.s32.f32 %v1310
        %v1375 = vcvt.s32.f32 %v1311
        %v1376 = vcvt.s32.f32 %v1312
        %v1377 = vcvt.s32.f32 %v1313
        %v1378 = vcvt.s32.f32 %v1314
        %v1379 = vcvt.s32.f32 %v1315
        %v1380 = vcvt.s32.f32 %v1316
        %v1381 = vcvt.s32.f32 %v1317
        %v1382 = vcvt.s32.f32 %v1318
        %v1383 = vcvt.s32.f32 %v1319
        %v1384 = vcvt.s32.f32 %v1320
        %v1385 = vcvt.s32.f32 %v1321
        %v1386 = vcvt.s32.f32 %v1322
        %v1387 = vcvt.s32.f32 %v1323
        %v1388 = vcvt.s32.f32 %v1324
        %v1389 = vcvt.s32.f32 %v1325
        %v1390 = vcvt.s32.f32 %v1326
        %v1391 = vcvt.s32.f32 %v1327
        %v1392 = vcvt.s32.f32 %v1328
        %v1393 = vcvt.s32.f32 %v1329
        %v1394 = vcvt.s32.f32 %v1330
        %v1395 = vcvt.s32.f32 %v1331
        %v1396 = vcvt.s32.f32 %v1332
        %v1397 = vcvt.s32.f32 %v1333
        %v1398 = vcvt.s32.f32 %v1334
        %v1399 = vcvt.s32.f32 %v1335
        %v1400 = vcvt.s32.f32 %v1336
        %v1401 = vcvt.s32.f32 %v1337
        %v1402 = vcvt.s32.f32 %v1338
        %v1403 = vcvt.s32.f32 %v1339
        %v1404 = vcvt.s32.f32 %v1340
        %v1405 = vcvt.s32.f32 %v1341
        %v1406 = vcvt.s32.f32 %v1342
        %v1407 = vcvt.s32.f32 %v1343
        %v1408 = vcvt.s32.f32 %v1344
        %v1409 = vcvt.s32.f32 %v1345
        %v1410 = vcvt.s32.f32 %v1346
        %v1411 = vcvt.s32.f32 %v1347
        %v1412 = vcvt.s32.f32 %v1348
        %v1413 = vcvt.s32.f32 %v1349
        %v1414 = vcvt.s32.f32 %v1350
        %v1415 = vcvt.s32.f32 %v1351
        %v1416 = vcvt.s32.f32 %v1352
        %v1417 = vcvt.s32.f32 %v1353
        %v1418 = vcvt.s32.f32 %v1354
        %v1419 = vcvt.s32.f32 %v1355
        %v1420 = vcvt.s32.f32 %v1356
        %v1421 = vcvt.s32.f32 %v1357
        %v1422 = vcvt.s32.f32 %v1358
        %v1423 = vcvt.s32.f32 %v1359
        %v1424 = vcvt.s32.f32 %v1360
        %v1425 = vcvt.s32.f32 %v1361
        %v1426 = vcvt.s32.f32 %v1362
        %v1427 = vcvt.s32.f32 %v1363
        %v1428 = vcvt.s32.f32 %v1364
        %v1429 = vcvt.s32.f32 %v1365
        %v1430 = vcvt.s32.f32 %v1366
        %v1431 = vcvt.s32.f32 %v1367
        %v1432 = vcvt.s32.f32 %v1368
        %v1433 = vcvt.s32.f32 %v1369
        %1434 = vst [vmem:[#allocation1] ss:$2 sm:$0xff] %v270
        %v1435 = vld.sshfl [vmem:[#allocation1] sm:$0xff pattern:$0x75316420]
        %v1436 = vld.sshfl [vmem:[#allocation1 + $0x8] sm:$0xff pattern:$0x75316420]
        %1439 = vmatpush.msra.mxu0 %v1400
        %1440 = vmatpush.msra.mxu0 %v1398
        %1441 = vmatpush.msra.mxu0 %v1396
        %1442 = vmatpush.msra.mxu0 %v1394
        %1443 = vmatpush.msra.mxu0 %v1392
        %1444 = vmatpush.msra.mxu0 %v1390
        %1445 = vmatpush.msra.mxu0 %v1388
        %1446 = vmatpush.msra.mxu0 %v1386
        %1447 = vmatpush.msra.mxu0 %v1384
        %1448 = vmatpush.msra.mxu0 %v1382
        %1449 = vmatpush.msra.mxu0 %v1380
        %1450 = vmatpush.msra.mxu0 %v1378
        %1451 = vmatpush.msra.mxu0 %v1376
        %1452 = vmatpush.msra.mxu0 %v1374
        %1453 = vmatpush.msra.mxu0 %v1372
        %1454 = vmatpush.msra.mxu0 %v1370
        %1455 = vmatmul.f32.gmra.mxu0 %v1435
        %v1456 = vpop.f32.mrf.mxu0
        %v1457 = vadd.f32 0.0, %v1456
        %1458 = vdwg.mxu0
        %1459 = vmatpush.msra.mxu0 %v1432
        %1460 = vmatpush.msra.mxu0 %v1430
        %1461 = vmatpush.msra.mxu0 %v1428
        %1462 = vmatpush.msra.mxu0 %v1426
        %1463 = vmatpush.msra.mxu0 %v1424
        %1464 = vmatpush.msra.mxu0 %v1422
        %1465 = vmatpush.msra.mxu0 %v1420
        %1466 = vmatpush.msra.mxu0 %v1418
        %1467 = vmatpush.msra.mxu0 %v1416
        %1468 = vmatpush.msra.mxu0 %v1414
        %1469 = vmatpush.msra.mxu0 %v1412
        %1470 = vmatpush.msra.mxu0 %v1410
        %1471 = vmatpush.msra.mxu0 %v1408
        %1472 = vmatpush.msra.mxu0 %v1406
        %1473 = vmatpush.msra.mxu0 %v1404
        %1474 = vmatpush.msra.mxu0 %v1402
        %1475 = vmatmul.f32.gmra.mxu0 %v1436
        %v1476 = vpop.f32.mrf.mxu0
        %v1477 = vadd.f32 %v1457, %v1476
        %1478 = vdwg.mxu0
        %1479 = vmatpush.msra.mxu0 %v1401
        %1480 = vmatpush.msra.mxu0 %v1399
        %1481 = vmatpush.msra.mxu0 %v1397
        %1482 = vmatpush.msra.mxu0 %v1395
        %1483 = vmatpush.msra.mxu0 %v1393
        %1484 = vmatpush.msra.mxu0 %v1391
        %1485 = vmatpush.msra.mxu0 %v1389
        %1486 = vmatpush.msra.mxu0 %v1387
        %1487 = vmatpush.msra.mxu0 %v1385
        %1488 = vmatpush.msra.mxu0 %v1383
        %1489 = vmatpush.msra.mxu0 %v1381
        %1490 = vmatpush.msra.mxu0 %v1379
        %1491 = vmatpush.msra.mxu0 %v1377
        %1492 = vmatpush.msra.mxu0 %v1375
        %1493 = vmatpush.msra.mxu0 %v1373
        %1494 = vmatpush.msra.mxu0 %v1371
        %1495 = vmatmul.f32.gmra.mxu0 %v1435
        %v1496 = vpop.f32.mrf.mxu0
        %v1497 = vadd.f32 0.0, %v1496
        %1498 = vdwg.mxu0
        %1499 = vmatpush.msra.mxu0 %v1433
        %1500 = vmatpush.msra.mxu0 %v1431
        %1501 = vmatpush.msra.mxu0 %v1429
        %1502 = vmatpush.msra.mxu0 %v1427
        %1503 = vmatpush.msra.mxu0 %v1425
        %1504 = vmatpush.msra.mxu0 %v1423
        %1505 = vmatpush.msra.mxu0 %v1421
        %1506 = vmatpush.msra.mxu0 %v1419
        %1507 = vmatpush.msra.mxu0 %v1417
        %1508 = vmatpush.msra.mxu0 %v1415
        %1509 = vmatpush.msra.mxu0 %v1413
        %1510 = vmatpush.msra.mxu0 %v1411
        %1511 = vmatpush.msra.mxu0 %v1409
        %1512 = vmatpush.msra.mxu0 %v1407
        %1513 = vmatpush.msra.mxu0 %v1405
        %1514 = vmatpush.msra.mxu0 %v1403
        %1515 = vmatmul.f32.gmra.mxu0 %v1436
        %v1516 = vpop.f32.mrf.mxu0
        %v1517 = vadd.f32 %v1497, %v1516
        %1518 = vdwg.mxu0
        %v1519 = vmul.f32 %v276, %v1212
        %vm1520 = vmand %vm912, %vm1218
        %vm1521 = vmand %vm1520, %vm1223
        %v1522 = vsel %vm1521, %v1519, 0.0
        %v1524 = vperm.slane %v1522, 0
        %v1525 = vperm.slane %v1522, 2
        %v1528 = vperm.slane %v1524, 0
        %v1529 = vperm.slane %v1525, 0
        %v1530 = vmul.f32 %v1477, %v1528
        %v1531 = vmul.f32 %v1517, %v1529
        %v1532 = vadd.f32 %v1235, %v1530
        %v1533 = vadd.f32 %v1236, %v1531
        %v1536 = vrot.slane %v1533, 4
        %vm1537 = vcmask 1043456
        %v1538 = vsel %vm1537, %v1532, %v1536
        %1540 = vst [vmem:[%s266] sm:$0xff] %v1538
        %s1541 = sand.u32 %s123, 1
        %s1542 = scalar_lea.sflag [#allocation4], %s1541
        %s1543 = sand.u32 %s123, 1
        %s1544 = smul.addr %s1543, 8
        %s1545 = scalar_lea.vmem [#allocation8], %s1544
        // Predicated region
        $region45: #{tpu_custom_call.1} parent=31 // pred_check
          %p1546 = pneg %p133
        $region46: #{tpu_custom_call.1} parent=31 // pred_check_branch
          %1548 = sbr.rel (%p1546) target = $region48
        $region47: #{tpu_custom_call.1} parent=31 // pred_region
          %s1549 = smul.u32 2, %s26
          %1551 = vsyncadd %s1542, 0
          %s1552 = smul.addr %s25, 2
          %s1553 = sadd.s32 %s1549, %s1552
          %s1554 = smul.addr %s1553, 4
          %s1555 = scalar_lea.hbm %s3, %s1554
          %s1557 = sshll.u32 %s1545, 4
          %s1558 = int_to_ptr.vmem [resolvable:$true] %s1557
          %s1559 = sshll.u32 %s1555, 4
          %s1560 = int_to_ptr.hbm [resolvable:$true] %s1559
          %1562 = dma.vmem_to_hbm [thread:$0]  %s1558, 128, %s1560, %s1542
        $region48: #{tpu_custom_call.1} parent=31 // pred_fallthru
          _
      $region32: #{tpu_custom_call.1} parent=5 // pred_fallthru
        _
      %p1563 = scmp.le.s32.totalorder 2, %s16
      // Predicated region
      $region49: #{tpu_custom_call.1} parent=5 // pred_check
        %p1564 = pneg %p1563
      $region50: #{tpu_custom_call.1} parent=5 // pred_check_branch
        %1566 = sbr.rel (%p1564) target = $region52
      $region51: #{tpu_custom_call.1} parent=5 // pred_region
        %s1567 = ssub.s32 %s16, 2
        // Predicated region
        $region53: #{tpu_custom_call.1} parent=51 // pred_check
          %p1568 = pneg %p139
        $region54: #{tpu_custom_call.1} parent=51 // pred_check_branch
          %1570 = sbr.rel (%p1568) target = $region56
        $region55: #{tpu_custom_call.1} parent=51 // pred_region
          %s1571 = sand.u32 %s124, 1
          %s1572 = scalar_lea.sflag [#allocation4], %s1571
          %s1573 = sand.u32 %s124, 1
          %s1574 = smul.addr %s1573, 8
          %s1575 = scalar_lea.vmem [#allocation8], %s1574
          %1577 = dma.done %s1572, 128
        $region56: #{tpu_custom_call.1} parent=51 // pred_fallthru
          _
      $region52: #{tpu_custom_call.1} parent=5 // pred_fallthru
        _
    $region6: #{tpu_custom_call.1} parent=1 // loop_footer
      %s20 = sadd.s32 1, %s16
    $region7: #{tpu_custom_call.1} parent=1 // loop_footer_branch
      %15 = sbr.rel target = $region3
    $region8: #{tpu_custom_call.1} parent=1 // loop_exit
      _
    %1578 = vsyncpa [#allocation3], 1
    %s1579 = scalar_lea.sflag [#allocation3], 1
    %1580 = vsyncpa %s1579, 1
    %1581 = vsyncpa [#allocation6], 1
    %s1582 = scalar_lea.sflag [#allocation6], 1
    %1583 = vsyncpa %s1582, 1
    %1584 = vsyncpa [#allocation4], 1
    %s1585 = scalar_lea.sflag [#allocation4], 1
    %1586 = vsyncpa %s1585, 1

</llo_original>
